<compile_context>
chip_gen: v6e
topology: v6e:2x2x1
jax: 0.10.0
libtpu: 0.0.40
codegen_flags: <defaults>
</compile_context>

<pallas_src>
import functools

import jax
import jax.numpy as jnp
from jax.experimental import pallas as pl
from jax.experimental.pallas import tpu as pltpu

# ----- tiny Llama config (synthetic, deterministic weights) -----
VOCAB = 256
HID = 64
INTER = 128
N_LAYERS = 2
N_HEADS = 4
HEAD_DIM = HID // N_HEADS           # 16
RMS_EPS = 1e-6
ROPE_THETA = 10000.0
NEG_INF = -1e30


# ---------------------------------------------------------------------------
# Pallas kernels (one grid step == one batch row; everything fused inside)
# ---------------------------------------------------------------------------
def _attn_block_kernel(h_ref, ln_ref, wqkv_ref, wo_ref, cos_ref, sin_ref,
                       bias_ref, o_ref, *, n_heads, head_dim, scale, eps):
    x = h_ref[...]                                          # [S, H] f32 (residual)
    # --- fused RMSNorm (f32) ---
    var = jnp.mean(x * x, axis=-1, keepdims=True)
    hn = x * jax.lax.rsqrt(var + eps) * ln_ref[...]

    # --- fused QKV projection, bf16 operands / f32 accumulate ---
    qkv = jnp.dot(hn.astype(jnp.bfloat16), wqkv_ref[...],
                  preferred_element_type=jnp.float32)       # [S, 3H] f32

    S, H = x.shape
    d2 = head_dim // 2
    cos = cos_ref[...]                                      # [S, D]
    sin = sin_ref[...]

    # causal + key-padding additive bias built in-kernel (no [B,S,S] HBM mask)
    row = jax.lax.broadcasted_iota(jnp.int32, (S, S), 0)
    col = jax.lax.broadcasted_iota(jnp.int32, (S, S), 1)
    mask_bias = jnp.where(col <= row,
                          jnp.float32(0.0), jnp.float32(NEG_INF))
    mask_bias = mask_bias + bias_ref[...]                   # [1,S] -> broadcast

    def rope(t):                                            # [S, D] f32
        t1 = t[:, :d2]
        t2 = t[:, d2:]
        rot = jnp.concatenate([-t2, t1], axis=-1)
        return t * cos + rot * sin

    outs = []
    for hd in range(n_heads):                               # static, unrolled
        q = rope(qkv[:, hd * head_dim:(hd + 1) * head_dim])
        k = rope(qkv[:, H + hd * head_dim: H + (hd + 1) * head_dim])
        v = qkv[:, 2 * H + hd * head_dim: 2 * H + (hd + 1) * head_dim]

        s = jax.lax.dot_general(q.astype(jnp.bfloat16), k.astype(jnp.bfloat16),
                                (((1,), (1,)), ((), ())),
                                preferred_element_type=jnp.float32) * scale
        s = s + mask_bias
        m = jnp.max(s, axis=-1, keepdims=True)
        p = jnp.exp(s - m)                                  # f32 softmax
        denom = jnp.sum(p, axis=-1, keepdims=True)
        o = jnp.dot(p.astype(jnp.bfloat16), v.astype(jnp.bfloat16),
                    preferred_element_type=jnp.float32)
        outs.append(o * pl.reciprocal(denom, approx=True))  # EUP divide

    attn = jnp.concatenate(outs, axis=-1)                   # [S, H]

    proj = jnp.dot(attn.astype(jnp.bfloat16), wo_ref[...],
                   preferred_element_type=jnp.float32)
    o_ref[...] = x + proj                                   # fused residual add


def _mlp_block_kernel(h_ref, ln_ref, wgu_ref, wd_ref, o_ref, *, inter, eps):
    x = h_ref[...]                                          # [S, H] f32 (residual)
    var = jnp.mean(x * x, axis=-1, keepdims=True)
    hn = x * jax.lax.rsqrt(var + eps) * ln_ref[...]

    gu = jnp.dot(hn.astype(jnp.bfloat16), wgu_ref[...],
                 preferred_element_type=jnp.float32)        # [S, 2I] lane-dense
    g = gu[:, :inter]
    u = gu[:, inter:]
    act = (g * (1.0 / (1.0 + jnp.exp(-g)))) * u             # SiLU(g)*u in f32

    down = jnp.dot(act.astype(jnp.bfloat16), wd_ref[...],
                   preferred_element_type=jnp.float32)
    o_ref[...] = x + down                                   # fused residual add


def _lm_head_kernel(h_ref, ln_ref, wlm_ref, o_ref, *, eps):
    x = h_ref[...]
    var = jnp.mean(x * x, axis=-1, keepdims=True)
    hn = x * jax.lax.rsqrt(var + eps) * ln_ref[...]
    o_ref[...] = jnp.dot(hn.astype(jnp.bfloat16), wlm_ref[...],
                         preferred_element_type=jnp.float32)


# ---------------------------------------------------------------------------
# Pallas call wrappers
# ---------------------------------------------------------------------------
def attn_block(h, ln1, wqkv, wo, cos, sin, pad_bias, B, S):
    M, H = h.shape
    kern = functools.partial(_attn_block_kernel, n_heads=N_HEADS,
                             head_dim=HEAD_DIM, scale=1.0 / (HEAD_DIM ** 0.5),
                             eps=RMS_EPS)
    return pl.pallas_call(
        kern,
        grid=(B,),
        in_specs=[
            pl.BlockSpec((S, H), lambda b: (b, 0)),            # h rows of batch b
            pl.BlockSpec((1, H), lambda b: (0, 0)),            # ln1
            pl.BlockSpec((H, 3 * H), lambda b: (0, 0)),        # fused Wqkv (bf16)
            pl.BlockSpec((H, H), lambda b: (0, 0)),            # Wo (bf16)
            pl.BlockSpec((S, HEAD_DIM), lambda b: (0, 0)),     # cos
            pl.BlockSpec((S, HEAD_DIM), lambda b: (0, 0)),     # sin
            pl.BlockSpec((None, 1, S), lambda b: (b, 0, 0)),   # key padding bias
        ],
        out_specs=pl.BlockSpec((S, H), lambda b: (b, 0)),
        out_shape=jax.ShapeDtypeStruct((M, H), jnp.float32),
        compiler_params=pltpu.CompilerParams(
            dimension_semantics=("parallel",)),
    )(h, ln1.reshape(1, H), wqkv, wo, cos, sin, pad_bias)


def mlp_block(h, ln2, wgu, wd, B, S):
    M, H = h.shape
    kern = functools.partial(_mlp_block_kernel, inter=INTER, eps=RMS_EPS)
    return pl.pallas_call(
        kern,
        grid=(B,),
        in_specs=[
            pl.BlockSpec((S, H), lambda b: (b, 0)),
            pl.BlockSpec((1, H), lambda b: (0, 0)),
            pl.BlockSpec((H, 2 * INTER), lambda b: (0, 0)),    # fused gate|up (bf16)
            pl.BlockSpec((INTER, H), lambda b: (0, 0)),        # Wdown (bf16)
        ],
        out_specs=pl.BlockSpec((S, H), lambda b: (b, 0)),
        out_shape=jax.ShapeDtypeStruct((M, H), jnp.float32),
        compiler_params=pltpu.CompilerParams(
            dimension_semantics=("parallel",)),
    )(h, ln2.reshape(1, H), wgu, wd)


def lm_head(h, ln_f, wlm, B, S):
    M, H = h.shape
    kern = functools.partial(_lm_head_kernel, eps=RMS_EPS)
    return pl.pallas_call(
        kern,
        grid=(B,),
        in_specs=[
            pl.BlockSpec((S, H), lambda b: (b, 0)),
            pl.BlockSpec((1, H), lambda b: (0, 0)),
            pl.BlockSpec((H, VOCAB), lambda b: (0, 0)),        # lm_head (bf16)
        ],
        out_specs=pl.BlockSpec((S, VOCAB), lambda b: (b, 0)),  # 256-lane dense
        out_shape=jax.ShapeDtypeStruct((M, VOCAB), jnp.float32),
        compiler_params=pltpu.CompilerParams(
            dimension_semantics=("parallel",)),
    )(h, ln_f.reshape(1, H), wlm)


# ---------------------------------------------------------------------------
# JAX glue: RoPE tables, padding bias, parameter init, full forward
# ---------------------------------------------------------------------------
def rope_cos_sin(seq_len, dim, theta=ROPE_THETA):
    inv_freq = 1.0 / (theta ** (jnp.arange(0, dim, 2, dtype=jnp.float32) / dim))
    pos = jnp.arange(seq_len, dtype=jnp.float32)
    freqs = jnp.outer(pos, inv_freq)                     # [S, D/2]
    emb = jnp.concatenate([freqs, freqs], axis=-1)       # [S, D]
    return jnp.cos(emb), jnp.sin(emb)


def init_params(key):
    def randn(k, shape, scale=0.02):
        return scale * jax.random.normal(k, shape, dtype=jnp.float32)

    keys = jax.random.split(key, 2 + N_LAYERS)
    params = {
        "embed": randn(keys[0], (VOCAB, HID)),
        "lm_head": randn(keys[1], (HID, VOCAB)).astype(jnp.bfloat16),
        "ln_f": jnp.ones((HID,), jnp.float32),
        "layers": [],
    }
    for l in range(N_LAYERS):
        lk = jax.random.split(keys[2 + l], 4)
        params["layers"].append({
            "ln1": jnp.ones((HID,), jnp.float32),
            "ln2": jnp.ones((HID,), jnp.float32),
            # fused q|k|v projection, stored [in, out] so kernels compute x @ W
            "wqkv": randn(lk[0], (HID, 3 * HID)).astype(jnp.bfloat16),
            "wo": randn(lk[1], (HID, HID)).astype(jnp.bfloat16),
            # fused gate|up projection
            "wgu": randn(lk[2], (HID, 2 * INTER)).astype(jnp.bfloat16),
            "wd": randn(lk[3], (INTER, HID)).astype(jnp.bfloat16),
        })
    return params


def forward(params, input_ids, attention_mask):
    B, S = input_ids.shape
    # TODO(synk): token-embedding gather stays in JAX (no clean tiny-shape
    # Pallas gather); everything downstream runs in 5 fused Pallas launches.
    h = jnp.take(params["embed"], input_ids.reshape(-1), axis=0)
    h = h.astype(jnp.float32)                                  # [B*S, H]

    cos, sin = rope_cos_sin(S, HEAD_DIM)                       # [S, D] each
    # key-padding additive bias [B, 1, S] (causal part is built in-kernel)
    pad_bias = jnp.where(attention_mask.astype(bool), 0.0, NEG_INF)
    pad_bias = pad_bias.astype(jnp.float32).reshape(B, 1, S)

    for layer in params["layers"]:
        # DummyCache.update() is identity -> current-step K/V only.
        h = attn_block(h, layer["ln1"], layer["wqkv"], layer["wo"],
                       cos, sin, pad_bias, B, S)
        h = mlp_block(h, layer["ln2"], layer["wgu"], layer["wd"], B, S)

    logits = lm_head(h, params["ln_f"], params["lm_head"], B, S)
    return logits.reshape(B, S, VOCAB)   # float32, matching HF logits.float()


if __name__ == "__main__":
    B, S = 2, 8
    key = jax.random.PRNGKey(0)
    kp, kid = jax.random.split(key)
    params = init_params(kp)

    input_ids = jax.random.randint(kid, (B, S), 0, VOCAB, dtype=jnp.int32)
    attention_mask = jnp.ones((B, S), dtype=jnp.int32).at[1, -2:].set(0)

    logits = jax.jit(forward)(params, input_ids, attention_mask)
    logits = jax.block_until_ready(logits)

    assert logits.shape == (B, S, VOCAB), logits.shape
    assert logits.dtype == jnp.float32, logits.dtype
    assert bool(jnp.all(jnp.isfinite(logits)))
    print("KERNEL_OK")
</pallas_src>

<mosaic_0001>
module attributes {stable_mosaic.version = 11 : i64} {
  func.func @_attn_block_kernel(%arg0: i32, %arg1: memref<8x64xf32, #tpu.memory_space<vmem>>, %arg2: memref<1x64xf32, #tpu.memory_space<vmem>>, %arg3: memref<64x192xbf16, #tpu.memory_space<vmem>>, %arg4: memref<64x64xbf16, #tpu.memory_space<vmem>>, %arg5: memref<8x16xf32, #tpu.memory_space<vmem>>, %arg6: memref<8x16xf32, #tpu.memory_space<vmem>>, %arg7: memref<1x1x8xf32, #tpu.memory_space<vmem>>, %arg8: memref<8x64xf32, #tpu.memory_space<vmem>>) attributes {dimension_semantics = [#tpu.dimension_semantics<parallel>], iteration_bounds = array<i64: 2>, scalar_prefetch = 0 : i64, scratch_operands = 0 : i64, tpu.core_type = #tpu.core_type<tc>, window_params = [{transform_indices = @transform_0, window_bounds = array<i64: 8, 64>}, {pipeline_mode = #tpu.pipeline_mode<synchronous>, transform_indices = @transform_1, window_bounds = array<i64: 1, 64>}, {pipeline_mode = #tpu.pipeline_mode<synchronous>, transform_indices = @transform_2, window_bounds = array<i64: 64, 192>}, {pipeline_mode = #tpu.pipeline_mode<synchronous>, transform_indices = @transform_3, window_bounds = array<i64: 64, 64>}, {pipeline_mode = #tpu.pipeline_mode<synchronous>, transform_indices = @transform_4, window_bounds = array<i64: 8, 16>}, {pipeline_mode = #tpu.pipeline_mode<synchronous>, transform_indices = @transform_5, window_bounds = array<i64: 8, 16>}, {transform_indices = @transform_6, window_bounds = array<i64: 1, 1, 8>}, {transform_indices = @transform_7, window_bounds = array<i64: 8, 64>}]} {
    %c0 = arith.constant 0 : index
    %c0_0 = arith.constant 0 : index
    %0 = vector.load %arg1[%c0, %c0_0] : memref<8x64xf32, #tpu.memory_space<vmem>>, vector<8x64xf32>
    %1 = arith.mulf %0, %0 : vector<8x64xf32>
    %cst = arith.constant dense<0.000000e+00> : vector<8xf32>
    %2 = vector.multi_reduction <add>, %1, %cst [1] : vector<8x64xf32> to vector<8xf32>
    %3 = vector.shape_cast %2 : vector<8xf32> to vector<8x1xf32>
    %cst_1 = arith.constant 6.400000e+01 : f32
    %4 = vector.broadcast %cst_1 : f32 to vector<8x1xf32>
    %5 = arith.divf %3, %4 : vector<8x1xf32>
    %cst_2 = arith.constant 9.99999997E-7 : f32
    %6 = vector.broadcast %cst_2 : f32 to vector<8x1xf32>
    %7 = arith.addf %5, %6 : vector<8x1xf32>
    %8 = math.rsqrt %7 : vector<8x1xf32>
    %9 = vector.broadcast %8 : vector<8x1xf32> to vector<8x64xf32>
    %10 = arith.mulf %0, %9 : vector<8x64xf32>
    %c0_3 = arith.constant 0 : index
    %c0_4 = arith.constant 0 : index
    %11 = vector.load %arg2[%c0_3, %c0_4] : memref<1x64xf32, #tpu.memory_space<vmem>>, vector<1x64xf32>
    %12 = vector.broadcast %11 : vector<1x64xf32> to vector<8x64xf32>
    %13 = arith.mulf %10, %12 : vector<8x64xf32>
    %14 = arith.truncf %13 : vector<8x64xf32> to vector<8x64xbf16>
    %c0_5 = arith.constant 0 : index
    %c0_6 = arith.constant 0 : index
    %15 = vector.load %arg3[%c0_5, %c0_6] : memref<64x192xbf16, #tpu.memory_space<vmem>>, vector<64x192xbf16>
    %cst_7 = arith.constant dense<0.000000e+00> : vector<8x192xf32>
    %16 = tpu.matmul %14, %15, %cst_7 {dimension_numbers = #tpu.dot_dimension_numbers<[1], [0], [0], [1], [0, 0, 1, 1], [], []>} : vector<8x64xbf16>, vector<64x192xbf16>, vector<8x192xf32> -> vector<8x192xf32>
    %c0_8 = arith.constant 0 : index
    %c0_9 = arith.constant 0 : index
    %17 = vector.load %arg5[%c0_8, %c0_9] : memref<8x16xf32, #tpu.memory_space<vmem>>, vector<8x16xf32>
    %c0_10 = arith.constant 0 : index
    %c0_11 = arith.constant 0 : index
    %18 = vector.load %arg6[%c0_10, %c0_11] : memref<8x16xf32, #tpu.memory_space<vmem>>, vector<8x16xf32>
    %19 = tpu.iota {dimensions = array<i32: 0>} : vector<8x8xi32>
    %20 = tpu.iota {dimensions = array<i32: 1>} : vector<8x8xi32>
    %21 = arith.cmpi sle, %20, %19 : vector<8x8xi32>
    %cst_12 = arith.constant 0.000000e+00 : f32
    %cst_13 = arith.constant -1.000000e+30 : f32
    %22 = vector.broadcast %cst_12 : f32 to vector<8x8xf32>
    %23 = vector.broadcast %cst_13 : f32 to vector<8x8xf32>
    %24 = arith.select %21, %22, %23 : vector<8x8xi1>, vector<8x8xf32>
    %c0_14 = arith.constant 0 : index
    %c0_15 = arith.constant 0 : index
    %c0_16 = arith.constant 0 : index
    %25 = vector.load %arg7[%c0_14, %c0_15, %c0_16] : memref<1x1x8xf32, #tpu.memory_space<vmem>>, vector<1x1x8xf32>
    %26 = vector.shape_cast %25 : vector<1x1x8xf32> to vector<1x8xf32>
    %27 = vector.broadcast %26 : vector<1x8xf32> to vector<8x8xf32>
    %28 = arith.addf %24, %27 : vector<8x8xf32>
    %29 = vector.extract_strided_slice %16 {offsets = [0, 0], sizes = [8, 16], strides = [1, 1]} : vector<8x192xf32> to vector<8x16xf32>
    %30 = vector.extract_strided_slice %29 {offsets = [0, 0], sizes = [8, 8], strides = [1, 1]} : vector<8x16xf32> to vector<8x8xf32>
    %31 = vector.extract_strided_slice %29 {offsets = [0, 8], sizes = [8, 8], strides = [1, 1]} : vector<8x16xf32> to vector<8x8xf32>
    %cst_17 = arith.constant 0.000000e+00 : f32
    %32 = vector.broadcast %cst_17 : f32 to vector<8x8xf32>
    %33 = arith.subf %32, %31 : vector<8x8xf32>
    %34 = tpu.concatenate %33, %30 in 1 : vector<8x8xf32>, vector<8x8xf32> -> vector<8x16xf32>
    %35 = arith.mulf %29, %17 : vector<8x16xf32>
    %36 = arith.mulf %34, %18 : vector<8x16xf32>
    %37 = arith.addf %35, %36 : vector<8x16xf32>
    %38 = vector.extract_strided_slice %16 {offsets = [0, 64], sizes = [8, 16], strides = [1, 1]} : vector<8x192xf32> to vector<8x16xf32>
    %39 = vector.extract_strided_slice %38 {offsets = [0, 0], sizes = [8, 8], strides = [1, 1]} : vector<8x16xf32> to vector<8x8xf32>
    %40 = vector.extract_strided_slice %38 {offsets = [0, 8], sizes = [8, 8], strides = [1, 1]} : vector<8x16xf32> to vector<8x8xf32>
    %cst_18 = arith.constant 0.000000e+00 : f32
    %41 = vector.broadcast %cst_18 : f32 to vector<8x8xf32>
    %42 = arith.subf %41, %40 : vector<8x8xf32>
    %43 = tpu.concatenate %42, %39 in 1 : vector<8x8xf32>, vector<8x8xf32> -> vector<8x16xf32>
    %44 = arith.mulf %38, %17 : vector<8x16xf32>
    %45 = arith.mulf %43, %18 : vector<8x16xf32>
    %46 = arith.addf %44, %45 : vector<8x16xf32>
    %47 = vector.extract_strided_slice %16 {offsets = [0, 128], sizes = [8, 16], strides = [1, 1]} : vector<8x192xf32> to vector<8x16xf32>
    %48 = arith.truncf %37 : vector<8x16xf32> to vector<8x16xbf16>
    %49 = arith.truncf %46 : vector<8x16xf32> to vector<8x16xbf16>
    %cst_19 = arith.constant dense<0.000000e+00> : vector<8x8xf32>
    %50 = tpu.matmul %48, %49, %cst_19 {dimension_numbers = #tpu.dot_dimension_numbers<[1], [1], [0], [0], [0, 0, 1, 0], [], []>} : vector<8x16xbf16>, vector<8x16xbf16>, vector<8x8xf32> -> vector<8x8xf32>
    %cst_20 = arith.constant 2.500000e-01 : f32
    %51 = vector.broadcast %cst_20 : f32 to vector<8x8xf32>
    %52 = arith.mulf %50, %51 : vector<8x8xf32>
    %53 = arith.addf %52, %28 : vector<8x8xf32>
    %cst_21 = arith.constant dense<0xFF800000> : vector<8xf32>
    %54 = vector.multi_reduction <maximumf>, %53, %cst_21 [1] : vector<8x8xf32> to vector<8xf32>
    %55 = vector.shape_cast %54 : vector<8xf32> to vector<8x1xf32>
    %56 = vector.broadcast %55 : vector<8x1xf32> to vector<8x8xf32>
    %57 = arith.subf %53, %56 : vector<8x8xf32>
    %58 = math.exp %57 : vector<8x8xf32>
    %cst_22 = arith.constant dense<0.000000e+00> : vector<8xf32>
    %59 = vector.multi_reduction <add>, %58, %cst_22 [1] : vector<8x8xf32> to vector<8xf32>
    %60 = vector.shape_cast %59 : vector<8xf32> to vector<8x1xf32>
    %61 = arith.truncf %58 : vector<8x8xf32> to vector<8x8xbf16>
    %62 = arith.truncf %47 : vector<8x16xf32> to vector<8x16xbf16>
    %cst_23 = arith.constant dense<0.000000e+00> : vector<8x16xf32>
    %63 = tpu.matmul %61, %62, %cst_23 {dimension_numbers = #tpu.dot_dimension_numbers<[1], [0], [0], [1], [0, 0, 1, 1], [], []>} : vector<8x8xbf16>, vector<8x16xbf16>, vector<8x16xf32> -> vector<8x16xf32>
    %64 = tpu.reciprocal %60 {approx = true} : vector<8x1xf32> -> vector<8x1xf32>
    %65 = vector.broadcast %64 : vector<8x1xf32> to vector<8x16xf32>
    %66 = arith.mulf %63, %65 : vector<8x16xf32>
    %67 = vector.extract_strided_slice %16 {offsets = [0, 16], sizes = [8, 16], strides = [1, 1]} : vector<8x192xf32> to vector<8x16xf32>
    %68 = vector.extract_strided_slice %67 {offsets = [0, 0], sizes = [8, 8], strides = [1, 1]} : vector<8x16xf32> to vector<8x8xf32>
    %69 = vector.extract_strided_slice %67 {offsets = [0, 8], sizes = [8, 8], strides = [1, 1]} : vector<8x16xf32> to vector<8x8xf32>
    %cst_24 = arith.constant 0.000000e+00 : f32
    %70 = vector.broadcast %cst_24 : f32 to vector<8x8xf32>
    %71 = arith.subf %70, %69 : vector<8x8xf32>
    %72 = tpu.concatenate %71, %68 in 1 : vector<8x8xf32>, vector<8x8xf32> -> vector<8x16xf32>
    %73 = arith.mulf %67, %17 : vector<8x16xf32>
    %74 = arith.mulf %72, %18 : vector<8x16xf32>
    %75 = arith.addf %73, %74 : vector<8x16xf32>
    %76 = vector.extract_strided_slice %16 {offsets = [0, 80], sizes = [8, 16], strides = [1, 1]} : vector<8x192xf32> to vector<8x16xf32>
    %77 = vector.extract_strided_slice %76 {offsets = [0, 0], sizes = [8, 8], strides = [1, 1]} : vector<8x16xf32> to vector<8x8xf32>
    %78 = vector.extract_strided_slice %76 {offsets = [0, 8], sizes = [8, 8], strides = [1, 1]} : vector<8x16xf32> to vector<8x8xf32>
    %cst_25 = arith.constant 0.000000e+00 : f32
    %79 = vector.broadcast %cst_25 : f32 to vector<8x8xf32>
    %80 = arith.subf %79, %78 : vector<8x8xf32>
    %81 = tpu.concatenate %80, %77 in 1 : vector<8x8xf32>, vector<8x8xf32> -> vector<8x16xf32>
    %82 = arith.mulf %76, %17 : vector<8x16xf32>
    %83 = arith.mulf %81, %18 : vector<8x16xf32>
    %84 = arith.addf %82, %83 : vector<8x16xf32>
    %85 = vector.extract_strided_slice %16 {offsets = [0, 144], sizes = [8, 16], strides = [1, 1]} : vector<8x192xf32> to vector<8x16xf32>
    %86 = arith.truncf %75 : vector<8x16xf32> to vector<8x16xbf16>
    %87 = arith.truncf %84 : vector<8x16xf32> to vector<8x16xbf16>
    %cst_26 = arith.constant dense<0.000000e+00> : vector<8x8xf32>
    %88 = tpu.matmul %86, %87, %cst_26 {dimension_numbers = #tpu.dot_dimension_numbers<[1], [1], [0], [0], [0, 0, 1, 0], [], []>} : vector<8x16xbf16>, vector<8x16xbf16>, vector<8x8xf32> -> vector<8x8xf32>
    %cst_27 = arith.constant 2.500000e-01 : f32
    %89 = vector.broadcast %cst_27 : f32 to vector<8x8xf32>
    %90 = arith.mulf %88, %89 : vector<8x8xf32>
    %91 = arith.addf %90, %28 : vector<8x8xf32>
    %cst_28 = arith.constant dense<0xFF800000> : vector<8xf32>
    %92 = vector.multi_reduction <maximumf>, %91, %cst_28 [1] : vector<8x8xf32> to vector<8xf32>
    %93 = vector.shape_cast %92 : vector<8xf32> to vector<8x1xf32>
    %94 = vector.broadcast %93 : vector<8x1xf32> to vector<8x8xf32>
    %95 = arith.subf %91, %94 : vector<8x8xf32>
    %96 = math.exp %95 : vector<8x8xf32>
    %cst_29 = arith.constant dense<0.000000e+00> : vector<8xf32>
    %97 = vector.multi_reduction <add>, %96, %cst_29 [1] : vector<8x8xf32> to vector<8xf32>
    %98 = vector.shape_cast %97 : vector<8xf32> to vector<8x1xf32>
    %99 = arith.truncf %96 : vector<8x8xf32> to vector<8x8xbf16>
    %100 = arith.truncf %85 : vector<8x16xf32> to vector<8x16xbf16>
    %cst_30 = arith.constant dense<0.000000e+00> : vector<8x16xf32>
    %101 = tpu.matmul %99, %100, %cst_30 {dimension_numbers = #tpu.dot_dimension_numbers<[1], [0], [0], [1], [0, 0, 1, 1], [], []>} : vector<8x8xbf16>, vector<8x16xbf16>, vector<8x16xf32> -> vector<8x16xf32>
    %102 = tpu.reciprocal %98 {approx = true} : vector<8x1xf32> -> vector<8x1xf32>
    %103 = vector.broadcast %102 : vector<8x1xf32> to vector<8x16xf32>
    %104 = arith.mulf %101, %103 : vector<8x16xf32>
    %105 = vector.extract_strided_slice %16 {offsets = [0, 32], sizes = [8, 16], strides = [1, 1]} : vector<8x192xf32> to vector<8x16xf32>
    %106 = vector.extract_strided_slice %105 {offsets = [0, 0], sizes = [8, 8], strides = [1, 1]} : vector<8x16xf32> to vector<8x8xf32>
    %107 = vector.extract_strided_slice %105 {offsets = [0, 8], sizes = [8, 8], strides = [1, 1]} : vector<8x16xf32> to vector<8x8xf32>
    %cst_31 = arith.constant 0.000000e+00 : f32
    %108 = vector.broadcast %cst_31 : f32 to vector<8x8xf32>
    %109 = arith.subf %108, %107 : vector<8x8xf32>
    %110 = tpu.concatenate %109, %106 in 1 : vector<8x8xf32>, vector<8x8xf32> -> vector<8x16xf32>
    %111 = arith.mulf %105, %17 : vector<8x16xf32>
    %112 = arith.mulf %110, %18 : vector<8x16xf32>
    %113 = arith.addf %111, %112 : vector<8x16xf32>
    %114 = vector.extract_strided_slice %16 {offsets = [0, 96], sizes = [8, 16], strides = [1, 1]} : vector<8x192xf32> to vector<8x16xf32>
    %115 = vector.extract_strided_slice %114 {offsets = [0, 0], sizes = [8, 8], strides = [1, 1]} : vector<8x16xf32> to vector<8x8xf32>
    %116 = vector.extract_strided_slice %114 {offsets = [0, 8], sizes = [8, 8], strides = [1, 1]} : vector<8x16xf32> to vector<8x8xf32>
    %cst_32 = arith.constant 0.000000e+00 : f32
    %117 = vector.broadcast %cst_32 : f32 to vector<8x8xf32>
    %118 = arith.subf %117, %116 : vector<8x8xf32>
    %119 = tpu.concatenate %118, %115 in 1 : vector<8x8xf32>, vector<8x8xf32> -> vector<8x16xf32>
    %120 = arith.mulf %114, %17 : vector<8x16xf32>
    %121 = arith.mulf %119, %18 : vector<8x16xf32>
    %122 = arith.addf %120, %121 : vector<8x16xf32>
    %123 = vector.extract_strided_slice %16 {offsets = [0, 160], sizes = [8, 16], strides = [1, 1]} : vector<8x192xf32> to vector<8x16xf32>
    %124 = arith.truncf %113 : vector<8x16xf32> to vector<8x16xbf16>
    %125 = arith.truncf %122 : vector<8x16xf32> to vector<8x16xbf16>
    %cst_33 = arith.constant dense<0.000000e+00> : vector<8x8xf32>
    %126 = tpu.matmul %124, %125, %cst_33 {dimension_numbers = #tpu.dot_dimension_numbers<[1], [1], [0], [0], [0, 0, 1, 0], [], []>} : vector<8x16xbf16>, vector<8x16xbf16>, vector<8x8xf32> -> vector<8x8xf32>
    %cst_34 = arith.constant 2.500000e-01 : f32
    %127 = vector.broadcast %cst_34 : f32 to vector<8x8xf32>
    %128 = arith.mulf %126, %127 : vector<8x8xf32>
    %129 = arith.addf %128, %28 : vector<8x8xf32>
    %cst_35 = arith.constant dense<0xFF800000> : vector<8xf32>
    %130 = vector.multi_reduction <maximumf>, %129, %cst_35 [1] : vector<8x8xf32> to vector<8xf32>
    %131 = vector.shape_cast %130 : vector<8xf32> to vector<8x1xf32>
    %132 = vector.broadcast %131 : vector<8x1xf32> to vector<8x8xf32>
    %133 = arith.subf %129, %132 : vector<8x8xf32>
    %134 = math.exp %133 : vector<8x8xf32>
    %cst_36 = arith.constant dense<0.000000e+00> : vector<8xf32>
    %135 = vector.multi_reduction <add>, %134, %cst_36 [1] : vector<8x8xf32> to vector<8xf32>
    %136 = vector.shape_cast %135 : vector<8xf32> to vector<8x1xf32>
    %137 = arith.truncf %134 : vector<8x8xf32> to vector<8x8xbf16>
    %138 = arith.truncf %123 : vector<8x16xf32> to vector<8x16xbf16>
    %cst_37 = arith.constant dense<0.000000e+00> : vector<8x16xf32>
    %139 = tpu.matmul %137, %138, %cst_37 {dimension_numbers = #tpu.dot_dimension_numbers<[1], [0], [0], [1], [0, 0, 1, 1], [], []>} : vector<8x8xbf16>, vector<8x16xbf16>, vector<8x16xf32> -> vector<8x16xf32>
    %140 = tpu.reciprocal %136 {approx = true} : vector<8x1xf32> -> vector<8x1xf32>
    %141 = vector.broadcast %140 : vector<8x1xf32> to vector<8x16xf32>
    %142 = arith.mulf %139, %141 : vector<8x16xf32>
    %143 = vector.extract_strided_slice %16 {offsets = [0, 48], sizes = [8, 16], strides = [1, 1]} : vector<8x192xf32> to vector<8x16xf32>
    %144 = vector.extract_strided_slice %143 {offsets = [0, 0], sizes = [8, 8], strides = [1, 1]} : vector<8x16xf32> to vector<8x8xf32>
    %145 = vector.extract_strided_slice %143 {offsets = [0, 8], sizes = [8, 8], strides = [1, 1]} : vector<8x16xf32> to vector<8x8xf32>
    %cst_38 = arith.constant 0.000000e+00 : f32
    %146 = vector.broadcast %cst_38 : f32 to vector<8x8xf32>
    %147 = arith.subf %146, %145 : vector<8x8xf32>
    %148 = tpu.concatenate %147, %144 in 1 : vector<8x8xf32>, vector<8x8xf32> -> vector<8x16xf32>
    %149 = arith.mulf %143, %17 : vector<8x16xf32>
    %150 = arith.mulf %148, %18 : vector<8x16xf32>
    %151 = arith.addf %149, %150 : vector<8x16xf32>
    %152 = vector.extract_strided_slice %16 {offsets = [0, 112], sizes = [8, 16], strides = [1, 1]} : vector<8x192xf32> to vector<8x16xf32>
    %153 = vector.extract_strided_slice %152 {offsets = [0, 0], sizes = [8, 8], strides = [1, 1]} : vector<8x16xf32> to vector<8x8xf32>
    %154 = vector.extract_strided_slice %152 {offsets = [0, 8], sizes = [8, 8], strides = [1, 1]} : vector<8x16xf32> to vector<8x8xf32>
    %cst_39 = arith.constant 0.000000e+00 : f32
    %155 = vector.broadcast %cst_39 : f32 to vector<8x8xf32>
    %156 = arith.subf %155, %154 : vector<8x8xf32>
    %157 = tpu.concatenate %156, %153 in 1 : vector<8x8xf32>, vector<8x8xf32> -> vector<8x16xf32>
    %158 = arith.mulf %152, %17 : vector<8x16xf32>
    %159 = arith.mulf %157, %18 : vector<8x16xf32>
    %160 = arith.addf %158, %159 : vector<8x16xf32>
    %161 = vector.extract_strided_slice %16 {offsets = [0, 176], sizes = [8, 16], strides = [1, 1]} : vector<8x192xf32> to vector<8x16xf32>
    %162 = arith.truncf %151 : vector<8x16xf32> to vector<8x16xbf16>
    %163 = arith.truncf %160 : vector<8x16xf32> to vector<8x16xbf16>
    %cst_40 = arith.constant dense<0.000000e+00> : vector<8x8xf32>
    %164 = tpu.matmul %162, %163, %cst_40 {dimension_numbers = #tpu.dot_dimension_numbers<[1], [1], [0], [0], [0, 0, 1, 0], [], []>} : vector<8x16xbf16>, vector<8x16xbf16>, vector<8x8xf32> -> vector<8x8xf32>
    %cst_41 = arith.constant 2.500000e-01 : f32
    %165 = vector.broadcast %cst_41 : f32 to vector<8x8xf32>
    %166 = arith.mulf %164, %165 : vector<8x8xf32>
    %167 = arith.addf %166, %28 : vector<8x8xf32>
    %cst_42 = arith.constant dense<0xFF800000> : vector<8xf32>
    %168 = vector.multi_reduction <maximumf>, %167, %cst_42 [1] : vector<8x8xf32> to vector<8xf32>
    %169 = vector.shape_cast %168 : vector<8xf32> to vector<8x1xf32>
    %170 = vector.broadcast %169 : vector<8x1xf32> to vector<8x8xf32>
    %171 = arith.subf %167, %170 : vector<8x8xf32>
    %172 = math.exp %171 : vector<8x8xf32>
    %cst_43 = arith.constant dense<0.000000e+00> : vector<8xf32>
    %173 = vector.multi_reduction <add>, %172, %cst_43 [1] : vector<8x8xf32> to vector<8xf32>
    %174 = vector.shape_cast %173 : vector<8xf32> to vector<8x1xf32>
    %175 = arith.truncf %172 : vector<8x8xf32> to vector<8x8xbf16>
    %176 = arith.truncf %161 : vector<8x16xf32> to vector<8x16xbf16>
    %cst_44 = arith.constant dense<0.000000e+00> : vector<8x16xf32>
    %177 = tpu.matmul %175, %176, %cst_44 {dimension_numbers = #tpu.dot_dimension_numbers<[1], [0], [0], [1], [0, 0, 1, 1], [], []>} : vector<8x8xbf16>, vector<8x16xbf16>, vector<8x16xf32> -> vector<8x16xf32>
    %178 = tpu.reciprocal %174 {approx = true} : vector<8x1xf32> -> vector<8x1xf32>
    %179 = vector.broadcast %178 : vector<8x1xf32> to vector<8x16xf32>
    %180 = arith.mulf %177, %179 : vector<8x16xf32>
    %181 = tpu.concatenate %66, %104, %142, %180 in 1 : vector<8x16xf32>, vector<8x16xf32>, vector<8x16xf32>, vector<8x16xf32> -> vector<8x64xf32>
    %182 = arith.truncf %181 : vector<8x64xf32> to vector<8x64xbf16>
    %c0_45 = arith.constant 0 : index
    %c0_46 = arith.constant 0 : index
    %183 = vector.load %arg4[%c0_45, %c0_46] : memref<64x64xbf16, #tpu.memory_space<vmem>>, vector<64x64xbf16>
    %cst_47 = arith.constant dense<0.000000e+00> : vector<8x64xf32>
    %184 = tpu.matmul %182, %183, %cst_47 {dimension_numbers = #tpu.dot_dimension_numbers<[1], [0], [0], [1], [0, 0, 1, 1], [], []>} : vector<8x64xbf16>, vector<64x64xbf16>, vector<8x64xf32> -> vector<8x64xf32>
    %185 = arith.addf %0, %184 : vector<8x64xf32>
    %c0_48 = arith.constant 0 : index
    %c0_49 = arith.constant 0 : index
    %186 = vector.load %arg8[%c0_48, %c0_49] : memref<8x64xf32, #tpu.memory_space<vmem>>, vector<8x64xf32>
    tpu.vector_store %arg8[%c0_48, %c0_49], %185 {strides = array<i32>} : memref<8x64xf32, #tpu.memory_space<vmem>>, vector<8x64xf32>,
    return
  }
  func.func @transform_0(%arg0: i32) -> (i32, i32) {
    %c0_i32 = arith.constant 0 : i32
    %c0_i32_0 = arith.constant 0 : i32
    return %arg0, %c0_i32 : i32, i32
  }
  func.func @transform_1(%arg0: i32) -> (i32, i32) {
    %c0_i32 = arith.constant 0 : i32
    %c0_i32_0 = arith.constant 0 : i32
    %c0_i32_1 = arith.constant 0 : i32
    return %c0_i32, %c0_i32_0 : i32, i32
  }
  func.func @transform_2(%arg0: i32) -> (i32, i32) {
    %c0_i32 = arith.constant 0 : i32
    %c0_i32_0 = arith.constant 0 : i32
    %c0_i32_1 = arith.constant 0 : i32
    return %c0_i32, %c0_i32_0 : i32, i32
  }
  func.func @transform_3(%arg0: i32) -> (i32, i32) {
    %c0_i32 = arith.constant 0 : i32
    %c0_i32_0 = arith.constant 0 : i32
    %c0_i32_1 = arith.constant 0 : i32
    return %c0_i32, %c0_i32_0 : i32, i32
  }
  func.func @transform_4(%arg0: i32) -> (i32, i32) {
    %c0_i32 = arith.constant 0 : i32
    %c0_i32_0 = arith.constant 0 : i32
    %c0_i32_1 = arith.constant 0 : i32
    return %c0_i32, %c0_i32_0 : i32, i32
  }
  func.func @transform_5(%arg0: i32) -> (i32, i32) {
    %c0_i32 = arith.constant 0 : i32
    %c0_i32_0 = arith.constant 0 : i32
    %c0_i32_1 = arith.constant 0 : i32
    return %c0_i32, %c0_i32_0 : i32, i32
  }
  func.func @transform_6(%arg0: i32) -> (i32, i32, i32) {
    %c0_i32 = arith.constant 0 : i32
    %c0_i32_0 = arith.constant 0 : i32
    %c0_i32_1 = arith.constant 0 : i32
    return %arg0, %c0_i32, %c0_i32_0 : i32, i32, i32
  }
  func.func @transform_7(%arg0: i32) -> (i32, i32) {
    %c0_i32 = arith.constant 0 : i32
    %c0_i32_0 = arith.constant 0 : i32
    return %arg0, %c0_i32 : i32, i32
  }
}

module attributes {stable_mosaic.version = 11 : i64} {
  func.func @_mlp_block_kernel(%arg0: i32, %arg1: memref<8x64xf32, #tpu.memory_space<vmem>>, %arg2: memref<1x64xf32, #tpu.memory_space<vmem>>, %arg3: memref<64x256xbf16, #tpu.memory_space<vmem>>, %arg4: memref<128x64xbf16, #tpu.memory_space<vmem>>, %arg5: memref<8x64xf32, #tpu.memory_space<vmem>>) attributes {dimension_semantics = [#tpu.dimension_semantics<parallel>], iteration_bounds = array<i64: 2>, scalar_prefetch = 0 : i64, scratch_operands = 0 : i64, tpu.core_type = #tpu.core_type<tc>, window_params = [{transform_indices = @transform_0, window_bounds = array<i64: 8, 64>}, {pipeline_mode = #tpu.pipeline_mode<synchronous>, transform_indices = @transform_1, window_bounds = array<i64: 1, 64>}, {pipeline_mode = #tpu.pipeline_mode<synchronous>, transform_indices = @transform_2, window_bounds = array<i64: 64, 256>}, {pipeline_mode = #tpu.pipeline_mode<synchronous>, transform_indices = @transform_3, window_bounds = array<i64: 128, 64>}, {transform_indices = @transform_4, window_bounds = array<i64: 8, 64>}]} {
    %c0 = arith.constant 0 : index
    %c0_0 = arith.constant 0 : index
    %0 = vector.load %arg1[%c0, %c0_0] : memref<8x64xf32, #tpu.memory_space<vmem>>, vector<8x64xf32>
    %1 = arith.mulf %0, %0 : vector<8x64xf32>
    %cst = arith.constant dense<0.000000e+00> : vector<8xf32>
    %2 = vector.multi_reduction <add>, %1, %cst [1] : vector<8x64xf32> to vector<8xf32>
    %3 = vector.shape_cast %2 : vector<8xf32> to vector<8x1xf32>
    %cst_1 = arith.constant 6.400000e+01 : f32
    %4 = vector.broadcast %cst_1 : f32 to vector<8x1xf32>
    %5 = arith.divf %3, %4 : vector<8x1xf32>
    %cst_2 = arith.constant 9.99999997E-7 : f32
    %6 = vector.broadcast %cst_2 : f32 to vector<8x1xf32>
    %7 = arith.addf %5, %6 : vector<8x1xf32>
    %8 = math.rsqrt %7 : vector<8x1xf32>
    %9 = vector.broadcast %8 : vector<8x1xf32> to vector<8x64xf32>
    %10 = arith.mulf %0, %9 : vector<8x64xf32>
    %c0_3 = arith.constant 0 : index
    %c0_4 = arith.constant 0 : index
    %11 = vector.load %arg2[%c0_3, %c0_4] : memref<1x64xf32, #tpu.memory_space<vmem>>, vector<1x64xf32>
    %12 = vector.broadcast %11 : vector<1x64xf32> to vector<8x64xf32>
    %13 = arith.mulf %10, %12 : vector<8x64xf32>
    %14 = arith.truncf %13 : vector<8x64xf32> to vector<8x64xbf16>
    %c0_5 = arith.constant 0 : index
    %c0_6 = arith.constant 0 : index
    %15 = vector.load %arg3[%c0_5, %c0_6] : memref<64x256xbf16, #tpu.memory_space<vmem>>, vector<64x256xbf16>
    %cst_7 = arith.constant dense<0.000000e+00> : vector<8x256xf32>
    %16 = tpu.matmul %14, %15, %cst_7 {dimension_numbers = #tpu.dot_dimension_numbers<[1], [0], [0], [1], [0, 0, 1, 1], [], []>} : vector<8x64xbf16>, vector<64x256xbf16>, vector<8x256xf32> -> vector<8x256xf32>
    %17 = vector.extract_strided_slice %16 {offsets = [0, 0], sizes = [8, 128], strides = [1, 1]} : vector<8x256xf32> to vector<8x128xf32>
    %18 = vector.extract_strided_slice %16 {offsets = [0, 128], sizes = [8, 128], strides = [1, 1]} : vector<8x256xf32> to vector<8x128xf32>
    %cst_8 = arith.constant 0.000000e+00 : f32
    %19 = vector.broadcast %cst_8 : f32 to vector<8x128xf32>
    %20 = arith.subf %19, %17 : vector<8x128xf32>
    %21 = math.exp %20 : vector<8x128xf32>
    %cst_9 = arith.constant 1.000000e+00 : f32
    %22 = vector.broadcast %cst_9 : f32 to vector<8x128xf32>
    %23 = arith.addf %22, %21 : vector<8x128xf32>
    %cst_10 = arith.constant 1.000000e+00 : f32
    %24 = vector.broadcast %cst_10 : f32 to vector<8x128xf32>
    %25 = arith.divf %24, %23 : vector<8x128xf32>
    %26 = arith.mulf %17, %25 : vector<8x128xf32>
    %27 = arith.mulf %26, %18 : vector<8x128xf32>
    %28 = arith.truncf %27 : vector<8x128xf32> to vector<8x128xbf16>
    %c0_11 = arith.constant 0 : index
    %c0_12 = arith.constant 0 : index
    %29 = vector.load %arg4[%c0_11, %c0_12] : memref<128x64xbf16, #tpu.memory_space<vmem>>, vector<128x64xbf16>
    %cst_13 = arith.constant dense<0.000000e+00> : vector<8x64xf32>
    %30 = tpu.matmul %28, %29, %cst_13 {dimension_numbers = #tpu.dot_dimension_numbers<[1], [0], [0], [1], [0, 0, 1, 1], [], []>} : vector<8x128xbf16>, vector<128x64xbf16>, vector<8x64xf32> -> vector<8x64xf32>
    %31 = arith.addf %0, %30 : vector<8x64xf32>
    %c0_14 = arith.constant 0 : index
    %c0_15 = arith.constant 0 : index
    %32 = vector.load %arg5[%c0_14, %c0_15] : memref<8x64xf32, #tpu.memory_space<vmem>>, vector<8x64xf32>
    tpu.vector_store %arg5[%c0_14, %c0_15], %31 {strides = array<i32>} : memref<8x64xf32, #tpu.memory_space<vmem>>, vector<8x64xf32>,
    return
  }
  func.func @transform_0(%arg0: i32) -> (i32, i32) {
    %c0_i32 = arith.constant 0 : i32
    %c0_i32_0 = arith.constant 0 : i32
    return %arg0, %c0_i32 : i32, i32
  }
  func.func @transform_1(%arg0: i32) -> (i32, i32) {
    %c0_i32 = arith.constant 0 : i32
    %c0_i32_0 = arith.constant 0 : i32
    %c0_i32_1 = arith.constant 0 : i32
    return %c0_i32, %c0_i32_0 : i32, i32
  }
  func.func @transform_2(%arg0: i32) -> (i32, i32) {
    %c0_i32 = arith.constant 0 : i32
    %c0_i32_0 = arith.constant 0 : i32
    %c0_i32_1 = arith.constant 0 : i32
    return %c0_i32, %c0_i32_0 : i32, i32
  }
  func.func @transform_3(%arg0: i32) -> (i32, i32) {
    %c0_i32 = arith.constant 0 : i32
    %c0_i32_0 = arith.constant 0 : i32
    %c0_i32_1 = arith.constant 0 : i32
    return %c0_i32, %c0_i32_0 : i32, i32
  }
  func.func @transform_4(%arg0: i32) -> (i32, i32) {
    %c0_i32 = arith.constant 0 : i32
    %c0_i32_0 = arith.constant 0 : i32
    return %arg0, %c0_i32 : i32, i32
  }
}

module attributes {stable_mosaic.version = 11 : i64} {
  func.func @_lm_head_kernel(%arg0: i32, %arg1: memref<8x64xf32, #tpu.memory_space<vmem>>, %arg2: memref<1x64xf32, #tpu.memory_space<vmem>>, %arg3: memref<64x256xbf16, #tpu.memory_space<vmem>>, %arg4: memref<8x256xf32, #tpu.memory_space<vmem>>) attributes {dimension_semantics = [#tpu.dimension_semantics<parallel>], iteration_bounds = array<i64: 2>, scalar_prefetch = 0 : i64, scratch_operands = 0 : i64, tpu.core_type = #tpu.core_type<tc>, window_params = [{transform_indices = @transform_0, window_bounds = array<i64: 8, 64>}, {pipeline_mode = #tpu.pipeline_mode<synchronous>, transform_indices = @transform_1, window_bounds = array<i64: 1, 64>}, {pipeline_mode = #tpu.pipeline_mode<synchronous>, transform_indices = @transform_2, window_bounds = array<i64: 64, 256>}, {transform_indices = @transform_3, window_bounds = array<i64: 8, 256>}]} {
    %c0 = arith.constant 0 : index
    %c0_0 = arith.constant 0 : index
    %0 = vector.load %arg1[%c0, %c0_0] : memref<8x64xf32, #tpu.memory_space<vmem>>, vector<8x64xf32>
    %1 = arith.mulf %0, %0 : vector<8x64xf32>
    %cst = arith.constant dense<0.000000e+00> : vector<8xf32>
    %2 = vector.multi_reduction <add>, %1, %cst [1] : vector<8x64xf32> to vector<8xf32>
    %3 = vector.shape_cast %2 : vector<8xf32> to vector<8x1xf32>
    %cst_1 = arith.constant 6.400000e+01 : f32
    %4 = vector.broadcast %cst_1 : f32 to vector<8x1xf32>
    %5 = arith.divf %3, %4 : vector<8x1xf32>
    %cst_2 = arith.constant 9.99999997E-7 : f32
    %6 = vector.broadcast %cst_2 : f32 to vector<8x1xf32>
    %7 = arith.addf %5, %6 : vector<8x1xf32>
    %8 = math.rsqrt %7 : vector<8x1xf32>
    %9 = vector.broadcast %8 : vector<8x1xf32> to vector<8x64xf32>
    %10 = arith.mulf %0, %9 : vector<8x64xf32>
    %c0_3 = arith.constant 0 : index
    %c0_4 = arith.constant 0 : index
    %11 = vector.load %arg2[%c0_3, %c0_4] : memref<1x64xf32, #tpu.memory_space<vmem>>, vector<1x64xf32>
    %12 = vector.broadcast %11 : vector<1x64xf32> to vector<8x64xf32>
    %13 = arith.mulf %10, %12 : vector<8x64xf32>
    %14 = arith.truncf %13 : vector<8x64xf32> to vector<8x64xbf16>
    %c0_5 = arith.constant 0 : index
    %c0_6 = arith.constant 0 : index
    %15 = vector.load %arg3[%c0_5, %c0_6] : memref<64x256xbf16, #tpu.memory_space<vmem>>, vector<64x256xbf16>
    %cst_7 = arith.constant dense<0.000000e+00> : vector<8x256xf32>
    %16 = tpu.matmul %14, %15, %cst_7 {dimension_numbers = #tpu.dot_dimension_numbers<[1], [0], [0], [1], [0, 0, 1, 1], [], []>} : vector<8x64xbf16>, vector<64x256xbf16>, vector<8x256xf32> -> vector<8x256xf32>
    %c0_8 = arith.constant 0 : index
    %c0_9 = arith.constant 0 : index
    %17 = vector.load %arg4[%c0_8, %c0_9] : memref<8x256xf32, #tpu.memory_space<vmem>>, vector<8x256xf32>
    tpu.vector_store %arg4[%c0_8, %c0_9], %16 {strides = array<i32>} : memref<8x256xf32, #tpu.memory_space<vmem>>, vector<8x256xf32>,
    return
  }
  func.func @transform_0(%arg0: i32) -> (i32, i32) {
    %c0_i32 = arith.constant 0 : i32
    %c0_i32_0 = arith.constant 0 : i32
    return %arg0, %c0_i32 : i32, i32
  }
  func.func @transform_1(%arg0: i32) -> (i32, i32) {
    %c0_i32 = arith.constant 0 : i32
    %c0_i32_0 = arith.constant 0 : i32
    %c0_i32_1 = arith.constant 0 : i32
    return %c0_i32, %c0_i32_0 : i32, i32
  }
  func.func @transform_2(%arg0: i32) -> (i32, i32) {
    %c0_i32 = arith.constant 0 : i32
    %c0_i32_0 = arith.constant 0 : i32
    %c0_i32_1 = arith.constant 0 : i32
    return %c0_i32, %c0_i32_0 : i32, i32
  }
  func.func @transform_3(%arg0: i32) -> (i32, i32) {
    %c0_i32 = arith.constant 0 : i32
    %c0_i32_0 = arith.constant 0 : i32
    return %arg0, %c0_i32 : i32, i32
  }
}

</mosaic_0001>

<llo_original>
// kernel: forward.6
$region0: #{forward.6}
  #allocation0 [shape = 'u32[]', space=smem, size = 0x4, offset = 0x4, fixed_abs, tag = 'smem constant byte address 0x4 - core index']
  #allocation1 [shape = 'u32[144,128]{1,0:T(1,128)}', space=vmem, size = 0x12000, scoped, tag = 'internal scratch']
  %s0 = inlined_call_operand.vmem [shape: f32[16,64], index: 0, kind: input, shape index: {}]
  %s1 = inlined_call_operand.vmem [shape: f32[1,64], index: 1, kind: input, shape index: {}]
  %s2 = inlined_call_operand.vmem [shape: bf16[64,256], index: 2, kind: input, shape index: {}]
  %s3 = inlined_call_operand.vmem [shape: bf16[128,64], index: 3, kind: input, shape index: {}]
  %s4 = inlined_call_operand.vmem [shape: f32[16,64], index: 4, kind: output, shape index: {}]
  %s5 = sld [smem:[#allocation0]]
  $region49: #{forward.6} parent=0
    _
  %s7 = ssub.s32 1, %s5
  %s8 = scalar_select 0, %s7, %s5
  loop: start=0, step=1, limit=4
  $region2: #{forward.6} parent=0 // loop_pre_header
    _
  $region3: #{forward.6} parent=0 // loop_header
    %s10 = sphi 0, %s14
    %p11 = scmp.ge.s32.totalorder %s10, 4
    %s20 = sphi 0, %s22
    %s23 = sphi 0, %s20
    %s24 = sphi 0, %s23
    %s40 = sphi 0, %s24
    %s44 = sphi 0, %s44
    %s46 = sphi 0, %s44
    %s47 = sphi 0, %s46
    %s61 = sphi 0, %s47
    %s65 = sphi 0, %s65
    %s67 = sphi 0, %s65
    %s68 = sphi 0, %s67
    %s82 = sphi 0, %s68
    %s86 = sphi 0, %s86
    %s88 = sphi 0, %s86
    %s89 = sphi 0, %s88
    %s103 = sphi 0, %s89
    %s109 = sphi 0, %s111
    %s112 = sphi 0, %s109
    %s113 = sphi 0, %s112
    %s129 = sphi 0, %s113
  $region4: #{forward.6} parent=0 // loop_header_branch
    %13 = sbr.rel (%p11) target = $region8
  $region5: #{forward.6} parent=0 // loop_body
    %s15 = ssub.s32 %s10, 1
    %s16 = ssub.s32 %s10, 2
    %s17 = sadd.s32 %s10, 1
    %s18 = ssub.s32 %s10, %s17
    %p19 = scmp.eq.s32.totalorder %s18, 0
    %s21 = sadd.s32 %s20, 1
    %s22 = scalar_select %p19, %s20, %s21
    %p25 = pneg %p19
    %p26 = scmp.eq.s32.totalorder %s10, 1
    %p27 = por %p25, %p26
    %p28 = scmp.ne.s32.totalorder %s20, %s23
    %p29 = scmp.eq.s32.totalorder %s10, 0
    %p30 = por %p28, %p29
    %p31 = scmp.ne.s32.totalorder %s20, %s23
    %p32 = scmp.eq.s32.totalorder %s15, 1
    %p33 = por %p31, %p32
    %p34 = scmp.ne.s32.totalorder %s23, %s24
    %p35 = scmp.eq.s32.totalorder %s15, 0
    %p36 = por %p34, %p35
    %p37 = scmp.ne.s32.totalorder %s23, %s24
    %p38 = scmp.eq.s32.totalorder %s16, 1
    %p39 = por %p37, %p38
    %p41 = scmp.ne.s32.totalorder %s24, %s40
    %p42 = scmp.eq.s32.totalorder %s16, 0
    %p43 = por %p41, %p42
    %s45 = sadd.s32 %s44, 1
    %p48 = scmp.eq.s32.totalorder %s10, 1
    %p49 = scmp.ne.s32.totalorder %s44, %s46
    %p50 = scmp.eq.s32.totalorder %s10, 0
    %p51 = por %p49, %p50
    %p52 = scmp.ne.s32.totalorder %s44, %s46
    %p53 = scmp.eq.s32.totalorder %s15, 1
    %p54 = por %p52, %p53
    %p55 = scmp.ne.s32.totalorder %s46, %s47
    %p56 = scmp.eq.s32.totalorder %s15, 0
    %p57 = por %p55, %p56
    %p58 = scmp.ne.s32.totalorder %s46, %s47
    %p59 = scmp.eq.s32.totalorder %s16, 1
    %p60 = por %p58, %p59
    %p62 = scmp.ne.s32.totalorder %s47, %s61
    %p63 = scmp.eq.s32.totalorder %s16, 0
    %p64 = por %p62, %p63
    %s66 = sadd.s32 %s65, 1
    %p69 = scmp.eq.s32.totalorder %s10, 1
    %p70 = scmp.ne.s32.totalorder %s65, %s67
    %p71 = scmp.eq.s32.totalorder %s10, 0
    %p72 = por %p70, %p71
    %p73 = scmp.ne.s32.totalorder %s65, %s67
    %p74 = scmp.eq.s32.totalorder %s15, 1
    %p75 = por %p73, %p74
    %p76 = scmp.ne.s32.totalorder %s67, %s68
    %p77 = scmp.eq.s32.totalorder %s15, 0
    %p78 = por %p76, %p77
    %p79 = scmp.ne.s32.totalorder %s67, %s68
    %p80 = scmp.eq.s32.totalorder %s16, 1
    %p81 = por %p79, %p80
    %p83 = scmp.ne.s32.totalorder %s68, %s82
    %p84 = scmp.eq.s32.totalorder %s16, 0
    %p85 = por %p83, %p84
    %s87 = sadd.s32 %s86, 1
    %p90 = scmp.eq.s32.totalorder %s10, 1
    %p91 = scmp.ne.s32.totalorder %s86, %s88
    %p92 = scmp.eq.s32.totalorder %s10, 0
    %p93 = por %p91, %p92
    %p94 = scmp.ne.s32.totalorder %s86, %s88
    %p95 = scmp.eq.s32.totalorder %s15, 1
    %p96 = por %p94, %p95
    %p97 = scmp.ne.s32.totalorder %s88, %s89
    %p98 = scmp.eq.s32.totalorder %s15, 0
    %p99 = por %p97, %p98
    %p100 = scmp.ne.s32.totalorder %s88, %s89
    %p101 = scmp.eq.s32.totalorder %s16, 1
    %p102 = por %p100, %p101
    %p104 = scmp.ne.s32.totalorder %s89, %s103
    %p105 = scmp.eq.s32.totalorder %s16, 0
    %p106 = por %p104, %p105
    %s107 = ssub.s32 %s10, %s17
    %p108 = scmp.eq.s32.totalorder %s107, 0
    %s110 = sadd.s32 %s109, 1
    %s111 = scalar_select %p108, %s109, %s110
    %p114 = pneg %p108
    %p115 = scmp.eq.s32.totalorder %s10, 1
    %p116 = por %p114, %p115
    %p117 = scmp.ne.s32.totalorder %s109, %s112
    %p118 = scmp.eq.s32.totalorder %s10, 0
    %p119 = por %p117, %p118
    %p120 = scmp.ne.s32.totalorder %s109, %s112
    %p121 = scmp.eq.s32.totalorder %s15, 1
    %p122 = por %p120, %p121
    %p123 = scmp.ne.s32.totalorder %s112, %s113
    %p124 = scmp.eq.s32.totalorder %s15, 0
    %p125 = por %p123, %p124
    %p126 = scmp.ne.s32.totalorder %s112, %s113
    %p127 = scmp.eq.s32.totalorder %s16, 1
    %p128 = por %p126, %p127
    %p130 = scmp.ne.s32.totalorder %s113, %s129
    %p131 = scmp.eq.s32.totalorder %s16, 0
    %p132 = por %p130, %p131
    %p133 = scmp.le.s32.totalorder 1, %s10
    %p134 = scmp.lt.s32.totalorder %s10, 3
    %p135 = pnand %p133, %p134
    %p136 = pneg %p135
    // Predicated region
    $region9: #{forward.6} parent=5 // pred_check
      _
    $region10: #{forward.6} parent=5 // pred_check_branch
      %138 = sbr.rel (%p135) target = $region12
    $region11: #{forward.6} parent=5 // pred_region
      %s139 = ssub.s32 %s10, 1
      // Predicated region
      $region13: #{forward.6} parent=11 // pred_check
        %p140 = pneg %p57
      $region14: #{forward.6} parent=11 // pred_check_branch
        %142 = sbr.rel (%p140) target = $region16
      $region15: #{forward.6} parent=11 // pred_region
        _
      $region16: #{forward.6} parent=11 // pred_fallthru
        _
      // Predicated region
      $region17: #{forward.6} parent=11 // pred_check
        %p143 = pneg %p78
      $region18: #{forward.6} parent=11 // pred_check_branch
        %145 = sbr.rel (%p143) target = $region20
      $region19: #{forward.6} parent=11 // pred_region
        _
      $region20: #{forward.6} parent=11 // pred_fallthru
        _
      // Predicated region
      $region21: #{forward.6} parent=11 // pred_check
        %p146 = pneg %p99
      $region22: #{forward.6} parent=11 // pred_check_branch
        %148 = sbr.rel (%p146) target = $region24
      $region23: #{forward.6} parent=11 // pred_region
        _
      $region24: #{forward.6} parent=11 // pred_fallthru
        _
    $region12: #{forward.6} parent=5 // pred_fallthru
      _
    %p149 = scmp.lt.s32.totalorder %s10, 2
    // Predicated region
    $region25: #{forward.6} parent=5 // pred_check
      %p150 = pneg %p149
    $region26: #{forward.6} parent=5 // pred_check_branch
      %152 = sbr.rel (%p150) target = $region28
    $region27: #{forward.6} parent=5 // pred_region
      // Predicated region
      $region29: #{forward.6} parent=27 // pred_check
        %p153 = pneg %p30
      $region30: #{forward.6} parent=27 // pred_check_branch
        %155 = sbr.rel (%p153) target = $region32
      $region31: #{forward.6} parent=27 // pred_region
        %p156 = scmp.lt.s32.totalorder %s10, 1
        %s157 = scalar_select %p156, %s10, 1
        %s158 = smul.addr %s157, 8
        %s159 = scalar_lea.vmem %s0, %s158
      $region32: #{forward.6} parent=27 // pred_fallthru
        _
    $region28: #{forward.6} parent=5 // pred_fallthru
      _
    %p160 = scmp.le.s32.totalorder 1, %s10
    %p161 = scmp.lt.s32.totalorder %s10, 3
    %p162 = pnand %p160, %p161
    %p163 = pneg %p162
    // Predicated region
    $region33: #{forward.6} parent=5 // pred_check
      _
    $region34: #{forward.6} parent=5 // pred_check_branch
      %165 = sbr.rel (%p162) target = $region36
    $region35: #{forward.6} parent=5 // pred_region
      %s166 = ssub.s32 %s10, 1
      %p167 = scmp.lt.s32.totalorder %s15, 1
      %s168 = scalar_select %p167, %s15, 1
      %s169 = smul.addr %s168, 8
      %s170 = scalar_lea.vmem %s0, %s169
      %p171 = pneg %p36
      %p172 = pneg %p33
      %p173 = pneg %p57
      %p174 = pneg %p54
      %p175 = pneg %p78
      %p176 = pneg %p75
      %p177 = pneg %p99
      %p178 = pneg %p96
      %p179 = pneg %p125
      %p180 = pneg %p122
      %p181 = scmp.lt.s32.totalorder %s15, 1
      %s182 = scalar_select %p181, %s15, 1
      %s183 = smul.addr %s182, 8
      %s184 = scalar_lea.vmem %s4, %s183
      %p185 = scmp.lt.s32.totalorder %s15, 1
      %s186 = scalar_select %p185, %s15, 1
      %s187 = smul.addr %s186, 8
      %s188 = scalar_lea.vmem %s0, %s187
      %p189 = scmp.lt.s32.totalorder %s15, 1
      %s190 = scalar_select %p189, %s15, 1
      %s191 = smul.addr %s190, 8
      %s192 = scalar_lea.vmem %s4, %s191
      %v194 = vld [vmem:[%s188] sm:$0xff]
      %v195 = vmul.f32 %v194, %v194
      %vm196 = vcmask 523264
      %v197 = vsel %vm196, %v195, 0.0
      %198 = vadd.xlane.f32.xlu0 %v197
      %v199 = vpop.xlane.xlu0 %198
      %v200 = vrcp.pop 64.0
      %v201 = vmul.f32 %v199, %v200
      %v202 = vadd.f32 %v201, 1e-06
      %v203 = vrsqrt.pop %v202
      %v204 = vmul.f32 %v194, %v203
      %v205 = vld [vmem:[%s1] sm:$0x1]
      %v207 = vlaneseq
      %v208 = vshrl.u32 %v207, 7
      %v209 = vsub.s32 0, %v208
      %v210 = vrot.slane %v205, %v209
      %v212 = vmul.f32 %v204, %v210
      %v213 = vpack.c.bf16 %v212, %v212
      %v214 = vld [vmem:[%s2] sm:$0xff]
      %v215 = vld [vmem:[%s2 + $0x8] sm:$0xff]
      %v216 = vld [vmem:[%s2 + $0x10] sm:$0xff]
      %v217 = vld [vmem:[%s2 + $0x18] sm:$0xff]
      %v218 = vld [vmem:[%s2 + $0x20] sm:$0xff]
      %v219 = vld [vmem:[%s2 + $0x28] sm:$0xff]
      %v220 = vld [vmem:[%s2 + $0x30] sm:$0xff]
      %v221 = vld [vmem:[%s2 + $0x38] sm:$0xff]
      %v230 = vunpack.c.l.b16 %v214
      %v231 = vunpack.c.h.b16 %v214
      %v232 = vunpack.c.l.b16 %v215
      %v233 = vunpack.c.h.b16 %v215
      %v234 = vunpack.c.l.b16 %v216
      %v235 = vunpack.c.h.b16 %v216
      %v236 = vunpack.c.l.b16 %v217
      %v237 = vunpack.c.h.b16 %v217
      %v238 = vunpack.c.l.b16 %v218
      %v239 = vunpack.c.h.b16 %v218
      %v240 = vunpack.c.l.b16 %v219
      %v241 = vunpack.c.h.b16 %v219
      %v242 = vunpack.c.l.b16 %v220
      %v243 = vunpack.c.h.b16 %v220
      %v244 = vunpack.c.l.b16 %v221
      %v245 = vunpack.c.h.b16 %v221
      %v246 = vpack.c.b16 %v232, %v230
      %v247 = vpack.c.b16 %v233, %v231
      %v248 = vpack.c.b16 %v236, %v234
      %v249 = vpack.c.b16 %v237, %v235
      %v250 = vpack.c.b16 %v240, %v238
      %v251 = vpack.c.b16 %v241, %v239
      %v252 = vpack.c.b16 %v244, %v242
      %v253 = vpack.c.b16 %v245, %v243
      %v263 = vsel %vm196, %v213, 0
      %265 = vmatprep.subr.bf16.mxu0 0
      %266 = vmatpush1.bf16.msra.mxu0 0
      %267 = vmatprep.subr.bf16.mxu0 0
      %268 = vmatpush1.bf16.msra.mxu0 0
      %269 = vmatprep.subr.bf16.mxu0 0
      %270 = vmatpush1.bf16.msra.mxu0 0
      %271 = vmatprep.subr.bf16.mxu0 0
      %272 = vmatpush1.bf16.msra.mxu0 0
      %273 = vmatprep.subr.bf16.mxu0 %v253
      %274 = vmatpush1.bf16.msra.mxu0 %v252
      %275 = vmatprep.subr.bf16.mxu0 %v251
      %276 = vmatpush1.bf16.msra.mxu0 %v250
      %277 = vmatprep.subr.bf16.mxu0 %v249
      %278 = vmatpush1.bf16.msra.mxu0 %v248
      %279 = vmatprep.subr.bf16.mxu0 %v247
      %280 = vmatpush1.bf16.msra.mxu0 %v246
      %281 = vmatprep.subr.bf16.mxu0 0
      %282 = vmatpush2.bf16.msra.mxu0 0
      %283 = vmatprep.subr.bf16.mxu0 0
      %284 = vmatpush2.bf16.msra.mxu0 0
      %285 = vmatprep.subr.bf16.mxu0 0
      %286 = vmatpush2.bf16.msra.mxu0 0
      %287 = vmatprep.subr.bf16.mxu0 0
      %288 = vmatpush2.bf16.msra.mxu0 0
      %289 = vmatprep.subr.bf16.mxu0 0
      %290 = vmatpush2.bf16.msra.mxu0 0
      %291 = vmatprep.subr.bf16.mxu0 0
      %292 = vmatpush2.bf16.msra.mxu0 0
      %293 = vmatprep.subr.bf16.mxu0 0
      %294 = vmatpush2.bf16.msra.mxu0 0
      %295 = vmatprep.subr.bf16.mxu0 0
      %296 = vmatpush2.bf16.msra.mxu0 0
      %297 = vmatprep.mubr.bf16.mxu0 0
      %298 = vmatmul.mubr.bf16.gmra.mxu0 %v263
      %v299 = vpop.f32.mrf.mxu0
      %v300 = vadd.f32 0.0, %v299
      %v301 = vpop.f32.mrf.mxu0
      %v302 = vadd.f32 0.0, %v301
      %v303 = vpop.f32.mrf.mxu0
      %v304 = vpop.f32.mrf.mxu0
      %305 = vdwg.mxu0
      %v306 = vsub.f32 0.0, %v300
      %v307 = vmul.f32 %v306, 1.442695
      %v308 = vpow.pop %v307
      %v309 = vadd.f32 %v308, 1.0
      %v310 = vrcp.pop %v309
      %v311 = vmul.f32 1.0, %v310
      %v312 = vmul.f32 %v300, %v311
      %v313 = vmul.f32 %v312, %v302
      %v314 = vpack.c.bf16 %v313, %v313
      %v315 = vld [vmem:[%s3] sm:$0xf]
      %v316 = vld [vmem:[%s3 + $0x4] sm:$0xf]
      %v317 = vld [vmem:[%s3 + $0x8] sm:$0xf]
      %v318 = vld [vmem:[%s3 + $0xc] sm:$0xf]
      %v319 = vld [vmem:[%s3 + $0x10] sm:$0xf]
      %v320 = vld [vmem:[%s3 + $0x14] sm:$0xf]
      %v321 = vld [vmem:[%s3 + $0x18] sm:$0xf]
      %v322 = vld [vmem:[%s3 + $0x1c] sm:$0xf]
      %v323 = vld [vmem:[%s3 + $0x20] sm:$0xf]
      %v324 = vld [vmem:[%s3 + $0x24] sm:$0xf]
      %v325 = vld [vmem:[%s3 + $0x28] sm:$0xf]
      %v326 = vld [vmem:[%s3 + $0x2c] sm:$0xf]
      %v327 = vld [vmem:[%s3 + $0x30] sm:$0xf]
      %v328 = vld [vmem:[%s3 + $0x34] sm:$0xf]
      %v329 = vld [vmem:[%s3 + $0x38] sm:$0xf]
      %v330 = vld [vmem:[%s3 + $0x3c] sm:$0xf]
      %v347 = vunpack.c.l.b16 %v315
      %v348 = vunpack.c.l.b16 %v316
      %v349 = vunpack.c.l.b16 %v317
      %v350 = vunpack.c.l.b16 %v318
      %v351 = vunpack.c.l.b16 %v319
      %v352 = vunpack.c.l.b16 %v320
      %v353 = vunpack.c.l.b16 %v321
      %v354 = vunpack.c.l.b16 %v322
      %v355 = vunpack.c.l.b16 %v323
      %v356 = vunpack.c.l.b16 %v324
      %v357 = vunpack.c.l.b16 %v325
      %v358 = vunpack.c.l.b16 %v326
      %v359 = vunpack.c.l.b16 %v327
      %v360 = vunpack.c.l.b16 %v328
      %v361 = vunpack.c.l.b16 %v329
      %v362 = vunpack.c.l.b16 %v330
      %v363 = vpack.c.b16 %v348, %v347
      %v364 = vpack.c.b16 %v350, %v349
      %v365 = vpack.c.b16 %v352, %v351
      %v366 = vpack.c.b16 %v354, %v353
      %v367 = vpack.c.b16 %v356, %v355
      %v368 = vpack.c.b16 %v358, %v357
      %v369 = vpack.c.b16 %v360, %v359
      %v370 = vpack.c.b16 %v362, %v361
      %379 = vmatprep.subr.bf16.mxu0 0
      %380 = vmatpush1.bf16.msra.mxu0 %v370
      %381 = vmatprep.subr.bf16.mxu0 0
      %382 = vmatpush1.bf16.msra.mxu0 %v369
      %383 = vmatprep.subr.bf16.mxu0 0
      %384 = vmatpush1.bf16.msra.mxu0 %v368
      %385 = vmatprep.subr.bf16.mxu0 0
      %386 = vmatpush1.bf16.msra.mxu0 %v367
      %387 = vmatprep.subr.bf16.mxu0 0
      %388 = vmatpush1.bf16.msra.mxu0 %v366
      %389 = vmatprep.subr.bf16.mxu0 0
      %390 = vmatpush1.bf16.msra.mxu0 %v365
      %391 = vmatprep.subr.bf16.mxu0 0
      %392 = vmatpush1.bf16.msra.mxu0 %v364
      %393 = vmatprep.subr.bf16.mxu0 0
      %394 = vmatpush1.bf16.msra.mxu0 %v363
      %395 = vmatprep.subr.bf16.mxu0 0
      %396 = vmatpush2.bf16.msra.mxu0 0
      %397 = vmatprep.subr.bf16.mxu0 0
      %398 = vmatpush2.bf16.msra.mxu0 0
      %399 = vmatprep.subr.bf16.mxu0 0
      %400 = vmatpush2.bf16.msra.mxu0 0
      %401 = vmatprep.subr.bf16.mxu0 0
      %402 = vmatpush2.bf16.msra.mxu0 0
      %403 = vmatprep.subr.bf16.mxu0 0
      %404 = vmatpush2.bf16.msra.mxu0 0
      %405 = vmatprep.subr.bf16.mxu0 0
      %406 = vmatpush2.bf16.msra.mxu0 0
      %407 = vmatprep.subr.bf16.mxu0 0
      %408 = vmatpush2.bf16.msra.mxu0 0
      %409 = vmatprep.subr.bf16.mxu0 0
      %410 = vmatpush2.bf16.msra.mxu0 0
      %411 = vmatprep.mubr.bf16.mxu0 0
      %412 = vmatmul.mubr.bf16.gmra.mxu0 %v314
      %v413 = vpop.f32.mrf.mxu0
      %v414 = vadd.f32 0.0, %v413
      %v415 = vpop.f32.mrf.mxu0
      %v416 = vpop.f32.mrf.mxu0
      %v417 = vpop.f32.mrf.mxu0
      %418 = vdwg.mxu0
      %v419 = vadd.f32 %v194, %v414
      %420 = vst.msk [vmem:[%s192] sm:$0xff] %vm196, %v419
      %p421 = scmp.lt.s32.totalorder %s15, 1
      %s422 = scalar_select %p421, %s15, 1
      %s423 = smul.addr %s422, 8
      %s424 = scalar_lea.vmem %s4, %s423
      // Predicated region
      $region37: #{forward.6} parent=35 // pred_check
        %p425 = pneg %p122
      $region38: #{forward.6} parent=35 // pred_check_branch
        %427 = sbr.rel (%p425) target = $region40
      $region39: #{forward.6} parent=35 // pred_region
        _
      $region40: #{forward.6} parent=35 // pred_fallthru
        _
    $region36: #{forward.6} parent=5 // pred_fallthru
      _
    %p428 = scmp.le.s32.totalorder 2, %s10
    // Predicated region
    $region41: #{forward.6} parent=5 // pred_check
      %p429 = pneg %p428
    $region42: #{forward.6} parent=5 // pred_check_branch
      %431 = sbr.rel (%p429) target = $region44
    $region43: #{forward.6} parent=5 // pred_region
      %s432 = ssub.s32 %s10, 2
      // Predicated region
      $region45: #{forward.6} parent=43 // pred_check
        %p433 = pneg %p128
      $region46: #{forward.6} parent=43 // pred_check_branch
        %435 = sbr.rel (%p433) target = $region48
      $region47: #{forward.6} parent=43 // pred_region
        %p436 = scmp.lt.s32.totalorder %s16, 1
        %s437 = scalar_select %p436, %s16, 1
        %s438 = smul.addr %s437, 8
        %s439 = scalar_lea.vmem %s4, %s438
      $region48: #{forward.6} parent=43 // pred_fallthru
        _
    $region44: #{forward.6} parent=5 // pred_fallthru
      _
  $region6: #{forward.6} parent=0 // loop_footer
    %s14 = sadd.s32 1, %s10
  $region7: #{forward.6} parent=0 // loop_footer_branch
    %9 = sbr.rel target = $region3
  $region8: #{forward.6} parent=0 // loop_exit
    _

// kernel: forward.9
$region0: #{forward.9}
  #allocation0 [shape = 'u32[]', space=smem, size = 0x4, offset = 0x4, fixed_abs, tag = 'smem constant byte address 0x4 - core index']
  #allocation1 [shape = 'u32[144,128]{1,0:T(1,128)}', space=vmem, size = 0x12000, scoped, tag = 'internal scratch']
  %s0 = inlined_call_operand.vmem [shape: f32[16,64], index: 0, kind: input, shape index: {}]
  %s1 = inlined_call_operand.vmem [shape: f32[1,64], index: 1, kind: input, shape index: {}]
  %s2 = inlined_call_operand.vmem [shape: bf16[64,256], index: 2, kind: input, shape index: {}]
  %s3 = inlined_call_operand.hbm [shape: f32[16,256], index: 3, kind: output, shape index: {}]
  %s4 = sld [smem:[#allocation0]]
  $region45: #{forward.9} parent=0
    _
  %s6 = ssub.s32 1, %s4
  %s7 = scalar_select 0, %s6, %s4
  $region1: #{forward.9} parent=0
    #allocation2 [shape = 'u8[16384]{0}', space=vmem, size = 0x4000, scoped, tag = 'output window, operand 0']
    #allocation3 [shape = 's32[2]{0}', space=sflag, size = 0x8, scoped, tag = 'scoped memory for forward.9']
    %8 = vsyncpa [#allocation3], 0
    %s9 = scalar_lea.sflag [#allocation3], 1
    %10 = vsyncpa %s9, 0
    loop: start=0, step=1, limit=4
    $region2: #{forward.9} parent=1 // loop_pre_header
      _
    $region3: #{forward.9} parent=1 // loop_header
      %s12 = sphi 0, %s16
      %p13 = scmp.ge.s32.totalorder %s12, 4
      %s22 = sphi 0, %s24
      %s25 = sphi 0, %s22
      %s26 = sphi 0, %s25
      %s42 = sphi 0, %s26
      %s46 = sphi 0, %s46
      %s48 = sphi 0, %s46
      %s49 = sphi 0, %s48
      %s63 = sphi 0, %s49
      %s67 = sphi 0, %s67
      %s69 = sphi 0, %s67
      %s70 = sphi 0, %s69
      %s84 = sphi 0, %s70
      %s90 = sphi 0, %s92
      %s93 = sphi 0, %s90
      %s94 = sphi 0, %s93
      %s110 = sphi 0, %s94
    $region4: #{forward.9} parent=1 // loop_header_branch
      %15 = sbr.rel (%p13) target = $region8
    $region5: #{forward.9} parent=1 // loop_body
      %s17 = ssub.s32 %s12, 1
      %s18 = ssub.s32 %s12, 2
      %s19 = sadd.s32 %s12, 1
      %s20 = ssub.s32 %s12, %s19
      %p21 = scmp.eq.s32.totalorder %s20, 0
      %s23 = sadd.s32 %s22, 1
      %s24 = scalar_select %p21, %s22, %s23
      %p27 = pneg %p21
      %p28 = scmp.eq.s32.totalorder %s12, 1
      %p29 = por %p27, %p28
      %p30 = scmp.ne.s32.totalorder %s22, %s25
      %p31 = scmp.eq.s32.totalorder %s12, 0
      %p32 = por %p30, %p31
      %p33 = scmp.ne.s32.totalorder %s22, %s25
      %p34 = scmp.eq.s32.totalorder %s17, 1
      %p35 = por %p33, %p34
      %p36 = scmp.ne.s32.totalorder %s25, %s26
      %p37 = scmp.eq.s32.totalorder %s17, 0
      %p38 = por %p36, %p37
      %p39 = scmp.ne.s32.totalorder %s25, %s26
      %p40 = scmp.eq.s32.totalorder %s18, 1
      %p41 = por %p39, %p40
      %p43 = scmp.ne.s32.totalorder %s26, %s42
      %p44 = scmp.eq.s32.totalorder %s18, 0
      %p45 = por %p43, %p44
      %s47 = sadd.s32 %s46, 1
      %p50 = scmp.eq.s32.totalorder %s12, 1
      %p51 = scmp.ne.s32.totalorder %s46, %s48
      %p52 = scmp.eq.s32.totalorder %s12, 0
      %p53 = por %p51, %p52
      %p54 = scmp.ne.s32.totalorder %s46, %s48
      %p55 = scmp.eq.s32.totalorder %s17, 1
      %p56 = por %p54, %p55
      %p57 = scmp.ne.s32.totalorder %s48, %s49
      %p58 = scmp.eq.s32.totalorder %s17, 0
      %p59 = por %p57, %p58
      %p60 = scmp.ne.s32.totalorder %s48, %s49
      %p61 = scmp.eq.s32.totalorder %s18, 1
      %p62 = por %p60, %p61
      %p64 = scmp.ne.s32.totalorder %s49, %s63
      %p65 = scmp.eq.s32.totalorder %s18, 0
      %p66 = por %p64, %p65
      %s68 = sadd.s32 %s67, 1
      %p71 = scmp.eq.s32.totalorder %s12, 1
      %p72 = scmp.ne.s32.totalorder %s67, %s69
      %p73 = scmp.eq.s32.totalorder %s12, 0
      %p74 = por %p72, %p73
      %p75 = scmp.ne.s32.totalorder %s67, %s69
      %p76 = scmp.eq.s32.totalorder %s17, 1
      %p77 = por %p75, %p76
      %p78 = scmp.ne.s32.totalorder %s69, %s70
      %p79 = scmp.eq.s32.totalorder %s17, 0
      %p80 = por %p78, %p79
      %p81 = scmp.ne.s32.totalorder %s69, %s70
      %p82 = scmp.eq.s32.totalorder %s18, 1
      %p83 = por %p81, %p82
      %p85 = scmp.ne.s32.totalorder %s70, %s84
      %p86 = scmp.eq.s32.totalorder %s18, 0
      %p87 = por %p85, %p86
      %s88 = ssub.s32 %s12, %s19
      %p89 = scmp.eq.s32.totalorder %s88, 0
      %s91 = sadd.s32 %s90, 1
      %s92 = scalar_select %p89, %s90, %s91
      %p95 = pneg %p89
      %p96 = scmp.eq.s32.totalorder %s12, 1
      %p97 = por %p95, %p96
      %p98 = scmp.ne.s32.totalorder %s90, %s93
      %p99 = scmp.eq.s32.totalorder %s12, 0
      %p100 = por %p98, %p99
      %p101 = scmp.ne.s32.totalorder %s90, %s93
      %p102 = scmp.eq.s32.totalorder %s17, 1
      %p103 = por %p101, %p102
      %p104 = scmp.ne.s32.totalorder %s93, %s94
      %p105 = scmp.eq.s32.totalorder %s17, 0
      %p106 = por %p104, %p105
      %p107 = scmp.ne.s32.totalorder %s93, %s94
      %p108 = scmp.eq.s32.totalorder %s18, 1
      %p109 = por %p107, %p108
      %p111 = scmp.ne.s32.totalorder %s94, %s110
      %p112 = scmp.eq.s32.totalorder %s18, 0
      %p113 = por %p111, %p112
      %p114 = scmp.le.s32.totalorder 1, %s12
      %p115 = scmp.lt.s32.totalorder %s12, 3
      %p116 = pnand %p114, %p115
      %p117 = pneg %p116
      // Predicated region
      $region9: #{forward.9} parent=5 // pred_check
        _
      $region10: #{forward.9} parent=5 // pred_check_branch
        %119 = sbr.rel (%p116) target = $region12
      $region11: #{forward.9} parent=5 // pred_region
        %s120 = ssub.s32 %s12, 1
        // Predicated region
        $region13: #{forward.9} parent=11 // pred_check
          %p121 = pneg %p59
        $region14: #{forward.9} parent=11 // pred_check_branch
          %123 = sbr.rel (%p121) target = $region16
        $region15: #{forward.9} parent=11 // pred_region
          _
        $region16: #{forward.9} parent=11 // pred_fallthru
          _
        // Predicated region
        $region17: #{forward.9} parent=11 // pred_check
          %p124 = pneg %p80
        $region18: #{forward.9} parent=11 // pred_check_branch
          %126 = sbr.rel (%p124) target = $region20
        $region19: #{forward.9} parent=11 // pred_region
          _
        $region20: #{forward.9} parent=11 // pred_fallthru
          _
      $region12: #{forward.9} parent=5 // pred_fallthru
        _
      %p127 = scmp.lt.s32.totalorder %s12, 2
      // Predicated region
      $region21: #{forward.9} parent=5 // pred_check
        %p128 = pneg %p127
      $region22: #{forward.9} parent=5 // pred_check_branch
        %130 = sbr.rel (%p128) target = $region24
      $region23: #{forward.9} parent=5 // pred_region
        // Predicated region
        $region25: #{forward.9} parent=23 // pred_check
          %p131 = pneg %p32
        $region26: #{forward.9} parent=23 // pred_check_branch
          %133 = sbr.rel (%p131) target = $region28
        $region27: #{forward.9} parent=23 // pred_region
          %p134 = scmp.lt.s32.totalorder %s12, 1
          %s135 = scalar_select %p134, %s12, 1
          %s136 = smul.addr %s135, 8
          %s137 = scalar_lea.vmem %s0, %s136
        $region28: #{forward.9} parent=23 // pred_fallthru
          _
      $region24: #{forward.9} parent=5 // pred_fallthru
        _
      %p138 = scmp.le.s32.totalorder 1, %s12
      %p139 = scmp.lt.s32.totalorder %s12, 3
      %p140 = pnand %p138, %p139
      %p141 = pneg %p140
      // Predicated region
      $region29: #{forward.9} parent=5 // pred_check
        _
      $region30: #{forward.9} parent=5 // pred_check_branch
        %143 = sbr.rel (%p140) target = $region32
      $region31: #{forward.9} parent=5 // pred_region
        %s144 = ssub.s32 %s12, 1
        %p145 = scmp.lt.s32.totalorder %s17, 1
        %s146 = scalar_select %p145, %s17, 1
        %s147 = smul.addr %s146, 8
        %s148 = scalar_lea.vmem %s0, %s147
        %p149 = pneg %p38
        %p150 = pneg %p35
        %p151 = pneg %p59
        %p152 = pneg %p56
        %p153 = pneg %p80
        %p154 = pneg %p77
        %p155 = pneg %p106
        %p156 = pneg %p103
        %s157 = sand.u32 %s93, 1
        %s158 = scalar_lea.sflag [#allocation3], %s157
        %s159 = sand.u32 %s93, 1
        %s160 = smul.addr %s159, 16
        %s161 = scalar_lea.vmem [#allocation2], %s160
        %p162 = scmp.lt.s32.totalorder %s17, 1
        %s163 = scalar_select %p162, %s17, 1
        %s164 = smul.addr %s163, 8
        %s165 = scalar_lea.vmem %s0, %s164
        %v167 = vld [vmem:[%s165] sm:$0xff]
        %v168 = vmul.f32 %v167, %v167
        %vm169 = vcmask 523264
        %v170 = vsel %vm169, %v168, 0.0
        %171 = vadd.xlane.f32.xlu0 %v170
        %v172 = vpop.xlane.xlu0 %171
        %v173 = vrcp.pop 64.0
        %v174 = vmul.f32 %v172, %v173
        %v175 = vadd.f32 %v174, 1e-06
        %v176 = vrsqrt.pop %v175
        %v177 = vmul.f32 %v167, %v176
        %v178 = vld [vmem:[%s1] sm:$0x1]
        %v180 = vlaneseq
        %v181 = vshrl.u32 %v180, 7
        %v182 = vsub.s32 0, %v181
        %v183 = vrot.slane %v178, %v182
        %v185 = vmul.f32 %v177, %v183
        %v186 = vpack.c.bf16 %v185, %v185
        %v187 = vld [vmem:[%s2] sm:$0xff]
        %v188 = vld [vmem:[%s2 + $0x8] sm:$0xff]
        %v189 = vld [vmem:[%s2 + $0x10] sm:$0xff]
        %v190 = vld [vmem:[%s2 + $0x18] sm:$0xff]
        %v191 = vld [vmem:[%s2 + $0x20] sm:$0xff]
        %v192 = vld [vmem:[%s2 + $0x28] sm:$0xff]
        %v193 = vld [vmem:[%s2 + $0x30] sm:$0xff]
        %v194 = vld [vmem:[%s2 + $0x38] sm:$0xff]
        %v203 = vunpack.c.l.b16 %v187
        %v204 = vunpack.c.h.b16 %v187
        %v205 = vunpack.c.l.b16 %v188
        %v206 = vunpack.c.h.b16 %v188
        %v207 = vunpack.c.l.b16 %v189
        %v208 = vunpack.c.h.b16 %v189
        %v209 = vunpack.c.l.b16 %v190
        %v210 = vunpack.c.h.b16 %v190
        %v211 = vunpack.c.l.b16 %v191
        %v212 = vunpack.c.h.b16 %v191
        %v213 = vunpack.c.l.b16 %v192
        %v214 = vunpack.c.h.b16 %v192
        %v215 = vunpack.c.l.b16 %v193
        %v216 = vunpack.c.h.b16 %v193
        %v217 = vunpack.c.l.b16 %v194
        %v218 = vunpack.c.h.b16 %v194
        %v219 = vpack.c.b16 %v205, %v203
        %v220 = vpack.c.b16 %v206, %v204
        %v221 = vpack.c.b16 %v209, %v207
        %v222 = vpack.c.b16 %v210, %v208
        %v223 = vpack.c.b16 %v213, %v211
        %v224 = vpack.c.b16 %v214, %v212
        %v225 = vpack.c.b16 %v217, %v215
        %v226 = vpack.c.b16 %v218, %v216
        %v236 = vsel %vm169, %v186, 0
        %238 = vmatprep.subr.bf16.mxu0 0
        %239 = vmatpush1.bf16.msra.mxu0 0
        %240 = vmatprep.subr.bf16.mxu0 0
        %241 = vmatpush1.bf16.msra.mxu0 0
        %242 = vmatprep.subr.bf16.mxu0 0
        %243 = vmatpush1.bf16.msra.mxu0 0
        %244 = vmatprep.subr.bf16.mxu0 0
        %245 = vmatpush1.bf16.msra.mxu0 0
        %246 = vmatprep.subr.bf16.mxu0 %v226
        %247 = vmatpush1.bf16.msra.mxu0 %v225
        %248 = vmatprep.subr.bf16.mxu0 %v224
        %249 = vmatpush1.bf16.msra.mxu0 %v223
        %250 = vmatprep.subr.bf16.mxu0 %v222
        %251 = vmatpush1.bf16.msra.mxu0 %v221
        %252 = vmatprep.subr.bf16.mxu0 %v220
        %253 = vmatpush1.bf16.msra.mxu0 %v219
        %254 = vmatprep.subr.bf16.mxu0 0
        %255 = vmatpush2.bf16.msra.mxu0 0
        %256 = vmatprep.subr.bf16.mxu0 0
        %257 = vmatpush2.bf16.msra.mxu0 0
        %258 = vmatprep.subr.bf16.mxu0 0
        %259 = vmatpush2.bf16.msra.mxu0 0
        %260 = vmatprep.subr.bf16.mxu0 0
        %261 = vmatpush2.bf16.msra.mxu0 0
        %262 = vmatprep.subr.bf16.mxu0 0
        %263 = vmatpush2.bf16.msra.mxu0 0
        %264 = vmatprep.subr.bf16.mxu0 0
        %265 = vmatpush2.bf16.msra.mxu0 0
        %266 = vmatprep.subr.bf16.mxu0 0
        %267 = vmatpush2.bf16.msra.mxu0 0
        %268 = vmatprep.subr.bf16.mxu0 0
        %269 = vmatpush2.bf16.msra.mxu0 0
        %270 = vmatprep.mubr.bf16.mxu0 0
        %271 = vmatmul.mubr.bf16.gmra.mxu0 %v236
        %v272 = vpop.f32.mrf.mxu0
        %v273 = vadd.f32 0.0, %v272
        %v274 = vpop.f32.mrf.mxu0
        %v275 = vadd.f32 0.0, %v274
        %v276 = vpop.f32.mrf.mxu0
        %v277 = vpop.f32.mrf.mxu0
        %278 = vdwg.mxu0
        %279 = vst [vmem:[%s161] sm:$0xff] %v273
        %280 = vst [vmem:[%s161 + $0x8] sm:$0xff] %v275
        %s281 = sand.u32 %s93, 1
        %s282 = scalar_lea.sflag [#allocation3], %s281
        %s283 = sand.u32 %s93, 1
        %s284 = smul.addr %s283, 16
        %s285 = scalar_lea.vmem [#allocation2], %s284
        // Predicated region
        $region33: #{forward.9} parent=31 // pred_check
          %p286 = pneg %p103
        $region34: #{forward.9} parent=31 // pred_check_branch
          %288 = sbr.rel (%p286) target = $region36
        $region35: #{forward.9} parent=31 // pred_region
          %s290 = ssub.s32 256, 256
          %291 = vsyncadd %s282, %s290
          %s292 = smul.addr %s17, 2
          %s293 = smul.addr %s292, 128
          %s294 = scalar_lea.hbm %s3, %s293
          %s296 = sshll.u32 %s285, 4
          %s297 = int_to_ptr.vmem [resolvable:$true] %s296
          %299 = dma.vmem_to_hbm [thread:$0]  %s297, 256, %s294, %s282
        $region36: #{forward.9} parent=31 // pred_fallthru
          _
      $region32: #{forward.9} parent=5 // pred_fallthru
        _
      %p300 = scmp.le.s32.totalorder 2, %s12
      // Predicated region
      $region37: #{forward.9} parent=5 // pred_check
        %p301 = pneg %p300
      $region38: #{forward.9} parent=5 // pred_check_branch
        %303 = sbr.rel (%p301) target = $region40
      $region39: #{forward.9} parent=5 // pred_region
        %s304 = ssub.s32 %s12, 2
        // Predicated region
        $region41: #{forward.9} parent=39 // pred_check
          %p305 = pneg %p109
        $region42: #{forward.9} parent=39 // pred_check_branch
          %307 = sbr.rel (%p305) target = $region44
        $region43: #{forward.9} parent=39 // pred_region
          %s308 = sand.u32 %s94, 1
          %s309 = scalar_lea.sflag [#allocation3], %s308
          %s310 = sand.u32 %s94, 1
          %s311 = smul.addr %s310, 16
          %s312 = scalar_lea.vmem [#allocation2], %s311
          %313 = dma.done %s309, 256
        $region44: #{forward.9} parent=39 // pred_fallthru
          _
      $region40: #{forward.9} parent=5 // pred_fallthru
        _
    $region6: #{forward.9} parent=1 // loop_footer
      %s16 = sadd.s32 1, %s12
    $region7: #{forward.9} parent=1 // loop_footer_branch
      %11 = sbr.rel target = $region3
    $region8: #{forward.9} parent=1 // loop_exit
      _
    %314 = vsyncpa [#allocation3], 1
    %s315 = scalar_lea.sflag [#allocation3], 1
    %316 = vsyncpa %s315, 1

// kernel: forward.5
$region0: #{forward.5}
  #allocation0 [shape = 'u32[]', space=smem, size = 0x4, offset = 0x4, fixed_abs, tag = 'smem constant byte address 0x4 - core index']
  #allocation1 [shape = 'u32[144,128]{1,0:T(1,128)}', space=vmem, size = 0x12000, scoped, tag = 'internal scratch']
  %s0 = inlined_call_operand.vmem [shape: f32[16,64], index: 0, kind: input, shape index: {}]
  %s1 = inlined_call_operand.vmem [shape: f32[1,64], index: 1, kind: input, shape index: {}]
  %s2 = inlined_call_operand.vmem [shape: bf16[64,192], index: 2, kind: input, shape index: {}]
  %s3 = inlined_call_operand.vmem [shape: bf16[64,64], index: 3, kind: input, shape index: {}]
  %s4 = inlined_call_operand.vmem [shape: f32[8,16], index: 4, kind: input, shape index: {}]
  %s5 = inlined_call_operand.vmem [shape: f32[8,16], index: 5, kind: input, shape index: {}]
  %s6 = inlined_call_operand.vmem [shape: f32[2,1,8], index: 6, kind: input, shape index: {}]
  %s7 = inlined_call_operand.vmem [shape: f32[16,64], index: 7, kind: output, shape index: {}]
  %s8 = sld [smem:[#allocation0]]
  $region61: #{forward.5} parent=0
    _
  %s10 = ssub.s32 1, %s8
  %s11 = scalar_select 0, %s10, %s8
  loop: start=0, step=1, limit=4
  $region2: #{forward.5} parent=0 // loop_pre_header
    _
  $region3: #{forward.5} parent=0 // loop_header
    %s13 = sphi 0, %s17
    %p14 = scmp.ge.s32.totalorder %s13, 4
    %s23 = sphi 0, %s25
    %s26 = sphi 0, %s23
    %s27 = sphi 0, %s26
    %s43 = sphi 0, %s27
    %s47 = sphi 0, %s47
    %s49 = sphi 0, %s47
    %s50 = sphi 0, %s49
    %s64 = sphi 0, %s50
    %s68 = sphi 0, %s68
    %s70 = sphi 0, %s68
    %s71 = sphi 0, %s70
    %s85 = sphi 0, %s71
    %s89 = sphi 0, %s89
    %s91 = sphi 0, %s89
    %s92 = sphi 0, %s91
    %s106 = sphi 0, %s92
    %s110 = sphi 0, %s110
    %s112 = sphi 0, %s110
    %s113 = sphi 0, %s112
    %s127 = sphi 0, %s113
    %s131 = sphi 0, %s131
    %s133 = sphi 0, %s131
    %s134 = sphi 0, %s133
    %s148 = sphi 0, %s134
    %s154 = sphi 0, %s156
    %s157 = sphi 0, %s154
    %s158 = sphi 0, %s157
    %s174 = sphi 0, %s158
    %s180 = sphi 0, %s182
    %s183 = sphi 0, %s180
    %s184 = sphi 0, %s183
    %s200 = sphi 0, %s184
  $region4: #{forward.5} parent=0 // loop_header_branch
    %16 = sbr.rel (%p14) target = $region8
  $region5: #{forward.5} parent=0 // loop_body
    %s18 = ssub.s32 %s13, 1
    %s19 = ssub.s32 %s13, 2
    %s20 = sadd.s32 %s13, 1
    %s21 = ssub.s32 %s13, %s20
    %p22 = scmp.eq.s32.totalorder %s21, 0
    %s24 = sadd.s32 %s23, 1
    %s25 = scalar_select %p22, %s23, %s24
    %p28 = pneg %p22
    %p29 = scmp.eq.s32.totalorder %s13, 1
    %p30 = por %p28, %p29
    %p31 = scmp.ne.s32.totalorder %s23, %s26
    %p32 = scmp.eq.s32.totalorder %s13, 0
    %p33 = por %p31, %p32
    %p34 = scmp.ne.s32.totalorder %s23, %s26
    %p35 = scmp.eq.s32.totalorder %s18, 1
    %p36 = por %p34, %p35
    %p37 = scmp.ne.s32.totalorder %s26, %s27
    %p38 = scmp.eq.s32.totalorder %s18, 0
    %p39 = por %p37, %p38
    %p40 = scmp.ne.s32.totalorder %s26, %s27
    %p41 = scmp.eq.s32.totalorder %s19, 1
    %p42 = por %p40, %p41
    %p44 = scmp.ne.s32.totalorder %s27, %s43
    %p45 = scmp.eq.s32.totalorder %s19, 0
    %p46 = por %p44, %p45
    %s48 = sadd.s32 %s47, 1
    %p51 = scmp.eq.s32.totalorder %s13, 1
    %p52 = scmp.ne.s32.totalorder %s47, %s49
    %p53 = scmp.eq.s32.totalorder %s13, 0
    %p54 = por %p52, %p53
    %p55 = scmp.ne.s32.totalorder %s47, %s49
    %p56 = scmp.eq.s32.totalorder %s18, 1
    %p57 = por %p55, %p56
    %p58 = scmp.ne.s32.totalorder %s49, %s50
    %p59 = scmp.eq.s32.totalorder %s18, 0
    %p60 = por %p58, %p59
    %p61 = scmp.ne.s32.totalorder %s49, %s50
    %p62 = scmp.eq.s32.totalorder %s19, 1
    %p63 = por %p61, %p62
    %p65 = scmp.ne.s32.totalorder %s50, %s64
    %p66 = scmp.eq.s32.totalorder %s19, 0
    %p67 = por %p65, %p66
    %s69 = sadd.s32 %s68, 1
    %p72 = scmp.eq.s32.totalorder %s13, 1
    %p73 = scmp.ne.s32.totalorder %s68, %s70
    %p74 = scmp.eq.s32.totalorder %s13, 0
    %p75 = por %p73, %p74
    %p76 = scmp.ne.s32.totalorder %s68, %s70
    %p77 = scmp.eq.s32.totalorder %s18, 1
    %p78 = por %p76, %p77
    %p79 = scmp.ne.s32.totalorder %s70, %s71
    %p80 = scmp.eq.s32.totalorder %s18, 0
    %p81 = por %p79, %p80
    %p82 = scmp.ne.s32.totalorder %s70, %s71
    %p83 = scmp.eq.s32.totalorder %s19, 1
    %p84 = por %p82, %p83
    %p86 = scmp.ne.s32.totalorder %s71, %s85
    %p87 = scmp.eq.s32.totalorder %s19, 0
    %p88 = por %p86, %p87
    %s90 = sadd.s32 %s89, 1
    %p93 = scmp.eq.s32.totalorder %s13, 1
    %p94 = scmp.ne.s32.totalorder %s89, %s91
    %p95 = scmp.eq.s32.totalorder %s13, 0
    %p96 = por %p94, %p95
    %p97 = scmp.ne.s32.totalorder %s89, %s91
    %p98 = scmp.eq.s32.totalorder %s18, 1
    %p99 = por %p97, %p98
    %p100 = scmp.ne.s32.totalorder %s91, %s92
    %p101 = scmp.eq.s32.totalorder %s18, 0
    %p102 = por %p100, %p101
    %p103 = scmp.ne.s32.totalorder %s91, %s92
    %p104 = scmp.eq.s32.totalorder %s19, 1
    %p105 = por %p103, %p104
    %p107 = scmp.ne.s32.totalorder %s92, %s106
    %p108 = scmp.eq.s32.totalorder %s19, 0
    %p109 = por %p107, %p108
    %s111 = sadd.s32 %s110, 1
    %p114 = scmp.eq.s32.totalorder %s13, 1
    %p115 = scmp.ne.s32.totalorder %s110, %s112
    %p116 = scmp.eq.s32.totalorder %s13, 0
    %p117 = por %p115, %p116
    %p118 = scmp.ne.s32.totalorder %s110, %s112
    %p119 = scmp.eq.s32.totalorder %s18, 1
    %p120 = por %p118, %p119
    %p121 = scmp.ne.s32.totalorder %s112, %s113
    %p122 = scmp.eq.s32.totalorder %s18, 0
    %p123 = por %p121, %p122
    %p124 = scmp.ne.s32.totalorder %s112, %s113
    %p125 = scmp.eq.s32.totalorder %s19, 1
    %p126 = por %p124, %p125
    %p128 = scmp.ne.s32.totalorder %s113, %s127
    %p129 = scmp.eq.s32.totalorder %s19, 0
    %p130 = por %p128, %p129
    %s132 = sadd.s32 %s131, 1
    %p135 = scmp.eq.s32.totalorder %s13, 1
    %p136 = scmp.ne.s32.totalorder %s131, %s133
    %p137 = scmp.eq.s32.totalorder %s13, 0
    %p138 = por %p136, %p137
    %p139 = scmp.ne.s32.totalorder %s131, %s133
    %p140 = scmp.eq.s32.totalorder %s18, 1
    %p141 = por %p139, %p140
    %p142 = scmp.ne.s32.totalorder %s133, %s134
    %p143 = scmp.eq.s32.totalorder %s18, 0
    %p144 = por %p142, %p143
    %p145 = scmp.ne.s32.totalorder %s133, %s134
    %p146 = scmp.eq.s32.totalorder %s19, 1
    %p147 = por %p145, %p146
    %p149 = scmp.ne.s32.totalorder %s134, %s148
    %p150 = scmp.eq.s32.totalorder %s19, 0
    %p151 = por %p149, %p150
    %s152 = ssub.s32 %s13, %s20
    %p153 = scmp.eq.s32.totalorder %s152, 0
    %s155 = sadd.s32 %s154, 1
    %s156 = scalar_select %p153, %s154, %s155
    %p159 = pneg %p153
    %p160 = scmp.eq.s32.totalorder %s13, 1
    %p161 = por %p159, %p160
    %p162 = scmp.ne.s32.totalorder %s154, %s157
    %p163 = scmp.eq.s32.totalorder %s13, 0
    %p164 = por %p162, %p163
    %p165 = scmp.ne.s32.totalorder %s154, %s157
    %p166 = scmp.eq.s32.totalorder %s18, 1
    %p167 = por %p165, %p166
    %p168 = scmp.ne.s32.totalorder %s157, %s158
    %p169 = scmp.eq.s32.totalorder %s18, 0
    %p170 = por %p168, %p169
    %p171 = scmp.ne.s32.totalorder %s157, %s158
    %p172 = scmp.eq.s32.totalorder %s19, 1
    %p173 = por %p171, %p172
    %p175 = scmp.ne.s32.totalorder %s158, %s174
    %p176 = scmp.eq.s32.totalorder %s19, 0
    %p177 = por %p175, %p176
    %s178 = ssub.s32 %s13, %s20
    %p179 = scmp.eq.s32.totalorder %s178, 0
    %s181 = sadd.s32 %s180, 1
    %s182 = scalar_select %p179, %s180, %s181
    %p185 = pneg %p179
    %p186 = scmp.eq.s32.totalorder %s13, 1
    %p187 = por %p185, %p186
    %p188 = scmp.ne.s32.totalorder %s180, %s183
    %p189 = scmp.eq.s32.totalorder %s13, 0
    %p190 = por %p188, %p189
    %p191 = scmp.ne.s32.totalorder %s180, %s183
    %p192 = scmp.eq.s32.totalorder %s18, 1
    %p193 = por %p191, %p192
    %p194 = scmp.ne.s32.totalorder %s183, %s184
    %p195 = scmp.eq.s32.totalorder %s18, 0
    %p196 = por %p194, %p195
    %p197 = scmp.ne.s32.totalorder %s183, %s184
    %p198 = scmp.eq.s32.totalorder %s19, 1
    %p199 = por %p197, %p198
    %p201 = scmp.ne.s32.totalorder %s184, %s200
    %p202 = scmp.eq.s32.totalorder %s19, 0
    %p203 = por %p201, %p202
    %p204 = scmp.le.s32.totalorder 1, %s13
    %p205 = scmp.lt.s32.totalorder %s13, 3
    %p206 = pnand %p204, %p205
    %p207 = pneg %p206
    // Predicated region
    $region9: #{forward.5} parent=5 // pred_check
      _
    $region10: #{forward.5} parent=5 // pred_check_branch
      %209 = sbr.rel (%p206) target = $region12
    $region11: #{forward.5} parent=5 // pred_region
      %s210 = ssub.s32 %s13, 1
      // Predicated region
      $region13: #{forward.5} parent=11 // pred_check
        %p211 = pneg %p60
      $region14: #{forward.5} parent=11 // pred_check_branch
        %213 = sbr.rel (%p211) target = $region16
      $region15: #{forward.5} parent=11 // pred_region
        _
      $region16: #{forward.5} parent=11 // pred_fallthru
        _
      // Predicated region
      $region17: #{forward.5} parent=11 // pred_check
        %p214 = pneg %p81
      $region18: #{forward.5} parent=11 // pred_check_branch
        %216 = sbr.rel (%p214) target = $region20
      $region19: #{forward.5} parent=11 // pred_region
        _
      $region20: #{forward.5} parent=11 // pred_fallthru
        _
      // Predicated region
      $region21: #{forward.5} parent=11 // pred_check
        %p217 = pneg %p102
      $region22: #{forward.5} parent=11 // pred_check_branch
        %219 = sbr.rel (%p217) target = $region24
      $region23: #{forward.5} parent=11 // pred_region
        _
      $region24: #{forward.5} parent=11 // pred_fallthru
        _
      // Predicated region
      $region25: #{forward.5} parent=11 // pred_check
        %p220 = pneg %p123
      $region26: #{forward.5} parent=11 // pred_check_branch
        %222 = sbr.rel (%p220) target = $region28
      $region27: #{forward.5} parent=11 // pred_region
        _
      $region28: #{forward.5} parent=11 // pred_fallthru
        _
      // Predicated region
      $region29: #{forward.5} parent=11 // pred_check
        %p223 = pneg %p144
      $region30: #{forward.5} parent=11 // pred_check_branch
        %225 = sbr.rel (%p223) target = $region32
      $region31: #{forward.5} parent=11 // pred_region
        _
      $region32: #{forward.5} parent=11 // pred_fallthru
        _
    $region12: #{forward.5} parent=5 // pred_fallthru
      _
    %p226 = scmp.lt.s32.totalorder %s13, 2
    // Predicated region
    $region33: #{forward.5} parent=5 // pred_check
      %p227 = pneg %p226
    $region34: #{forward.5} parent=5 // pred_check_branch
      %229 = sbr.rel (%p227) target = $region36
    $region35: #{forward.5} parent=5 // pred_region
      // Predicated region
      $region37: #{forward.5} parent=35 // pred_check
        %p230 = pneg %p33
      $region38: #{forward.5} parent=35 // pred_check_branch
        %232 = sbr.rel (%p230) target = $region40
      $region39: #{forward.5} parent=35 // pred_region
        %p233 = scmp.lt.s32.totalorder %s13, 1
        %s234 = scalar_select %p233, %s13, 1
        %s235 = smul.addr %s234, 8
        %s236 = scalar_lea.vmem %s0, %s235
      $region40: #{forward.5} parent=35 // pred_fallthru
        _
      // Predicated region
      $region41: #{forward.5} parent=35 // pred_check
        %p237 = pneg %p164
      $region42: #{forward.5} parent=35 // pred_check_branch
        %239 = sbr.rel (%p237) target = $region44
      $region43: #{forward.5} parent=35 // pred_region
        %p240 = scmp.lt.s32.totalorder %s13, 1
        %s241 = scalar_select %p240, %s13, 1
        %s242 = scalar_lea.vmem %s6, %s241
      $region44: #{forward.5} parent=35 // pred_fallthru
        _
    $region36: #{forward.5} parent=5 // pred_fallthru
      _
    %p243 = scmp.le.s32.totalorder 1, %s13
    %p244 = scmp.lt.s32.totalorder %s13, 3
    %p245 = pnand %p243, %p244
    %p246 = pneg %p245
    // Predicated region
    $region45: #{forward.5} parent=5 // pred_check
      _
    $region46: #{forward.5} parent=5 // pred_check_branch
      %248 = sbr.rel (%p245) target = $region48
    $region47: #{forward.5} parent=5 // pred_region
      %s249 = ssub.s32 %s13, 1
      %p250 = scmp.lt.s32.totalorder %s18, 1
      %s251 = scalar_select %p250, %s18, 1
      %s252 = smul.addr %s251, 8
      %s253 = scalar_lea.vmem %s0, %s252
      %p254 = pneg %p39
      %p255 = pneg %p36
      %p256 = pneg %p60
      %p257 = pneg %p57
      %p258 = pneg %p81
      %p259 = pneg %p78
      %p260 = pneg %p102
      %p261 = pneg %p99
      %p262 = pneg %p123
      %p263 = pneg %p120
      %p264 = pneg %p144
      %p265 = pneg %p141
      %p266 = scmp.lt.s32.totalorder %s18, 1
      %s267 = scalar_select %p266, %s18, 1
      %s268 = scalar_lea.vmem %s6, %s267
      %p269 = pneg %p170
      %p270 = pneg %p167
      %p271 = pneg %p196
      %p272 = pneg %p193
      %p273 = scmp.lt.s32.totalorder %s18, 1
      %s274 = scalar_select %p273, %s18, 1
      %s275 = smul.addr %s274, 8
      %s276 = scalar_lea.vmem %s7, %s275
      %p277 = scmp.lt.s32.totalorder %s18, 1
      %s278 = scalar_select %p277, %s18, 1
      %s279 = smul.addr %s278, 8
      %s280 = scalar_lea.vmem %s0, %s279
      %p281 = scmp.lt.s32.totalorder %s18, 1
      %s282 = scalar_select %p281, %s18, 1
      %s283 = scalar_lea.vmem %s6, %s282
      %p284 = scmp.lt.s32.totalorder %s18, 1
      %s285 = scalar_select %p284, %s18, 1
      %s286 = smul.addr %s285, 8
      %s287 = scalar_lea.vmem %s7, %s286
      %v289 = vld [vmem:[%s280] sm:$0xff]
      %v290 = vmul.f32 %v289, %v289
      %vm291 = vcmask 523264
      %v292 = vsel %vm291, %v290, 0.0
      %293 = vadd.xlane.f32.xlu0 %v292
      %v294 = vpop.xlane.xlu0 %293
      %v295 = vrcp.pop 64.0
      %v296 = vmul.f32 %v294, %v295
      %v297 = vadd.f32 %v296, 1e-06
      %v298 = vrsqrt.pop %v297
      %v299 = vmul.f32 %v289, %v298
      %v300 = vld [vmem:[%s1] sm:$0x1]
      %v302 = vlaneseq
      %v303 = vshrl.u32 %v302, 7
      %v304 = vsub.s32 0, %v303
      %v305 = vrot.slane %v300, %v304
      %v307 = vmul.f32 %v299, %v305
      %v308 = vpack.c.bf16 %v307, %v307
      %v309 = vld [vmem:[%s2] sm:$0xff]
      %v310 = vld [vmem:[%s2 + $0x8] sm:$0xff]
      %v311 = vld [vmem:[%s2 + $0x10] sm:$0xff]
      %v312 = vld [vmem:[%s2 + $0x18] sm:$0xff]
      %v313 = vld [vmem:[%s2 + $0x20] sm:$0xff]
      %v314 = vld [vmem:[%s2 + $0x28] sm:$0xff]
      %v315 = vld [vmem:[%s2 + $0x30] sm:$0xff]
      %v316 = vld [vmem:[%s2 + $0x38] sm:$0xff]
      %v325 = vunpack.c.l.b16 %v309
      %v326 = vunpack.c.h.b16 %v309
      %v327 = vunpack.c.l.b16 %v310
      %v328 = vunpack.c.h.b16 %v310
      %v329 = vunpack.c.l.b16 %v311
      %v330 = vunpack.c.h.b16 %v311
      %v331 = vunpack.c.l.b16 %v312
      %v332 = vunpack.c.h.b16 %v312
      %v333 = vunpack.c.l.b16 %v313
      %v334 = vunpack.c.h.b16 %v313
      %v335 = vunpack.c.l.b16 %v314
      %v336 = vunpack.c.h.b16 %v314
      %v337 = vunpack.c.l.b16 %v315
      %v338 = vunpack.c.h.b16 %v315
      %v339 = vunpack.c.l.b16 %v316
      %v340 = vunpack.c.h.b16 %v316
      %v341 = vpack.c.b16 %v327, %v325
      %v342 = vpack.c.b16 %v328, %v326
      %v343 = vpack.c.b16 %v331, %v329
      %v344 = vpack.c.b16 %v332, %v330
      %v345 = vpack.c.b16 %v335, %v333
      %v346 = vpack.c.b16 %v336, %v334
      %v347 = vpack.c.b16 %v339, %v337
      %v348 = vpack.c.b16 %v340, %v338
      %v358 = vsel %vm291, %v308, 0
      %360 = vmatprep.subr.bf16.mxu0 0
      %361 = vmatpush1.bf16.msra.mxu0 0
      %362 = vmatprep.subr.bf16.mxu0 0
      %363 = vmatpush1.bf16.msra.mxu0 0
      %364 = vmatprep.subr.bf16.mxu0 0
      %365 = vmatpush1.bf16.msra.mxu0 0
      %366 = vmatprep.subr.bf16.mxu0 0
      %367 = vmatpush1.bf16.msra.mxu0 0
      %368 = vmatprep.subr.bf16.mxu0 %v348
      %369 = vmatpush1.bf16.msra.mxu0 %v347
      %370 = vmatprep.subr.bf16.mxu0 %v346
      %371 = vmatpush1.bf16.msra.mxu0 %v345
      %372 = vmatprep.subr.bf16.mxu0 %v344
      %373 = vmatpush1.bf16.msra.mxu0 %v343
      %374 = vmatprep.subr.bf16.mxu0 %v342
      %375 = vmatpush1.bf16.msra.mxu0 %v341
      %376 = vmatprep.subr.bf16.mxu0 0
      %377 = vmatpush2.bf16.msra.mxu0 0
      %378 = vmatprep.subr.bf16.mxu0 0
      %379 = vmatpush2.bf16.msra.mxu0 0
      %380 = vmatprep.subr.bf16.mxu0 0
      %381 = vmatpush2.bf16.msra.mxu0 0
      %382 = vmatprep.subr.bf16.mxu0 0
      %383 = vmatpush2.bf16.msra.mxu0 0
      %384 = vmatprep.subr.bf16.mxu0 0
      %385 = vmatpush2.bf16.msra.mxu0 0
      %386 = vmatprep.subr.bf16.mxu0 0
      %387 = vmatpush2.bf16.msra.mxu0 0
      %388 = vmatprep.subr.bf16.mxu0 0
      %389 = vmatpush2.bf16.msra.mxu0 0
      %390 = vmatprep.subr.bf16.mxu0 0
      %391 = vmatpush2.bf16.msra.mxu0 0
      %392 = vmatprep.mubr.bf16.mxu0 0
      %393 = vmatmul.mubr.bf16.gmra.mxu0 %v358
      %v394 = vpop.f32.mrf.mxu0
      %v395 = vadd.f32 0.0, %v394
      %v396 = vpop.f32.mrf.mxu0
      %v397 = vadd.f32 0.0, %v396
      %v398 = vpop.f32.mrf.mxu0
      %v399 = vpop.f32.mrf.mxu0
      %400 = vdwg.mxu0
      %v401 = vld [vmem:[%s4] sm:$0xff]
      %v402 = vld [vmem:[%s5] sm:$0xff]
      %v403 = vlaneseq
      %v404 = vshrl.u32 %v403, 7
      %v405 = vlaneseq
      %v406 = vand.u32 %v405, 127
      %vm407 = vcmp.le.s32.totalorder %v406, %v404
      %v408 = vsel %vm407, 0.0, -1e+30
      %v409 = vld [vmem:[%s283] sm:$0x1]
      %v411 = vlaneseq
      %v412 = vshrl.u32 %v411, 7
      %v413 = vsub.s32 0, %v412
      %v414 = vrot.slane %v409, %v413
      %v416 = vadd.f32 %v408, %v414
      %v417 = vsub.f32 0.0, %v395
      %419 = vrot.lane.b32.xlu0 %v417, 120
      %v420 = vpop.permute.xlu0 %419
      %423 = vrot.lane.b32.xlu0 %v395, 8
      %v424 = vpop.permute.xlu0 %423
      %vm426 = vcmask 64512
      %v427 = vsel %vm426, %v420, %v424
      %v428 = vmul.f32 %v395, %v401
      %v429 = vmul.f32 %v427, %v402
      %v430 = vadd.f32 %v428, %v429
      %431 = vrot.lane.b32.xlu0 %v417, 56
      %v432 = vpop.permute.xlu0 %431
      %434 = vrot.lane.b32.xlu0 %v395, 72
      %v435 = vpop.permute.xlu0 %434
      %v437 = vsel %vm426, %v432, %v435
      %439 = vrot.lane.b32.xlu0 %v401, 64
      %v440 = vpop.permute.xlu0 %439
      %v442 = vmul.f32 %v395, %v440
      %v443 = vmul.f32 %v437, %v402
      %445 = vrot.lane.b32.xlu0 %v443, 64
      %v446 = vpop.permute.xlu0 %445
      %v448 = vadd.f32 %v442, %v446
      %v449 = vpack.c.bf16 %v430, %v430
      %v450 = vpack.c.bf16 %v448, %v448
      %452 = vrot.lane.b32.xlu0 %v450, 64
      %v453 = vpop.permute.xlu0 %452
      %vm454 = vcmask 130048
      %v456 = vsel %vm454, %v449, 0
      %v459 = vsel %vm454, %v453, 0
      %461 = vmatprep.subr.bf16.mxu0 0
      %462 = vmatpush1.bf16.xpose.msra.mxu0 0
      %463 = vmatprep.subr.bf16.mxu0 0
      %464 = vmatpush1.bf16.xpose.msra.mxu0 0
      %465 = vmatprep.subr.bf16.mxu0 0
      %466 = vmatpush1.bf16.xpose.msra.mxu0 0
      %467 = vmatprep.subr.bf16.mxu0 0
      %468 = vmatpush1.bf16.xpose.msra.mxu0 0
      %469 = vmatprep.subr.bf16.mxu0 0
      %470 = vmatpush1.bf16.xpose.msra.mxu0 0
      %471 = vmatprep.subr.bf16.mxu0 0
      %472 = vmatpush1.bf16.xpose.msra.mxu0 0
      %473 = vmatprep.subr.bf16.mxu0 0
      %474 = vmatpush1.bf16.xpose.msra.mxu0 0
      %475 = vmatprep.subr.bf16.mxu0 0
      %476 = vmatpush1.bf16.xpose.msra.mxu0 %v459
      %477 = vmatprep.subr.bf16.mxu0 0
      %478 = vmatpush2.bf16.xpose.msra.mxu0 0
      %479 = vmatprep.subr.bf16.mxu0 0
      %480 = vmatpush2.bf16.xpose.msra.mxu0 0
      %481 = vmatprep.subr.bf16.mxu0 0
      %482 = vmatpush2.bf16.xpose.msra.mxu0 0
      %483 = vmatprep.subr.bf16.mxu0 0
      %484 = vmatpush2.bf16.xpose.msra.mxu0 0
      %485 = vmatprep.subr.bf16.mxu0 0
      %486 = vmatpush2.bf16.xpose.msra.mxu0 0
      %487 = vmatprep.subr.bf16.mxu0 0
      %488 = vmatpush2.bf16.xpose.msra.mxu0 0
      %489 = vmatprep.subr.bf16.mxu0 0
      %490 = vmatpush2.bf16.xpose.msra.mxu0 0
      %491 = vmatprep.subr.bf16.mxu0 0
      %492 = vmatpush2.bf16.xpose.msra.mxu0 0
      %493 = vmatprep.mubr.bf16.mxu0 0
      %494 = vmatmul.mubr.bf16.gmra.mxu0 %v456
      %v495 = vpop.f32.mrf.mxu0
      %v496 = vadd.f32 0.0, %v495
      %v497 = vpop.f32.mrf.mxu0
      %v498 = vpop.f32.mrf.mxu0
      %v499 = vpop.f32.mrf.mxu0
      %500 = vdwg.mxu0
      %v501 = vmul.f32 %v496, 0.25
      %v502 = vadd.f32 %v501, %v416
      %v503 = vsel %vm426, %v502, -inf
      %504 = vmax.xlane.f32.xlu0 %v503
      %v505 = vpop.xlane.xlu0 %504
      %v506 = vsub.f32 %v502, %v505
      %v507 = vmul.f32 %v506, 1.442695
      %v508 = vpow.pop %v507
      %v509 = vsel %vm426, %v508, 0.0
      %510 = vadd.xlane.f32.xlu0 %v509
      %v511 = vpop.xlane.xlu0 %510
      %v512 = vpack.c.bf16 %v508, %v508
      %v513 = vpack.c.bf16 %v397, %v397
      %v515 = vsel %vm426, %v512, 0
      %vm517 = vcmask 1043456
      %v519 = vsel %vm517, %v513, 0
      %521 = vmatprep.subr.bf16.mxu0 0
      %522 = vmatpush1.bf16.msra.mxu0 0
      %523 = vmatprep.subr.bf16.mxu0 0
      %524 = vmatpush1.bf16.msra.mxu0 0
      %525 = vmatprep.subr.bf16.mxu0 0
      %526 = vmatpush1.bf16.msra.mxu0 0
      %527 = vmatprep.subr.bf16.mxu0 0
      %528 = vmatpush1.bf16.msra.mxu0 0
      %529 = vmatprep.subr.bf16.mxu0 0
      %530 = vmatpush1.bf16.msra.mxu0 0
      %531 = vmatprep.subr.bf16.mxu0 0
      %532 = vmatpush1.bf16.msra.mxu0 0
      %533 = vmatprep.subr.bf16.mxu0 0
      %534 = vmatpush1.bf16.msra.mxu0 0
      %535 = vmatprep.subr.bf16.mxu0 0
      %536 = vmatpush1.bf16.msra.mxu0 %v519
      %537 = vmatprep.subr.bf16.mxu0 0
      %538 = vmatpush2.bf16.msra.mxu0 0
      %539 = vmatprep.subr.bf16.mxu0 0
      %540 = vmatpush2.bf16.msra.mxu0 0
      %541 = vmatprep.subr.bf16.mxu0 0
      %542 = vmatpush2.bf16.msra.mxu0 0
      %543 = vmatprep.subr.bf16.mxu0 0
      %544 = vmatpush2.bf16.msra.mxu0 0
      %545 = vmatprep.subr.bf16.mxu0 0
      %546 = vmatpush2.bf16.msra.mxu0 0
      %547 = vmatprep.subr.bf16.mxu0 0
      %548 = vmatpush2.bf16.msra.mxu0 0
      %549 = vmatprep.subr.bf16.mxu0 0
      %550 = vmatpush2.bf16.msra.mxu0 0
      %551 = vmatprep.subr.bf16.mxu0 0
      %552 = vmatpush2.bf16.msra.mxu0 0
      %553 = vmatprep.mubr.bf16.mxu0 0
      %554 = vmatmul.mubr.bf16.gmra.mxu0 %v515
      %v555 = vpop.f32.mrf.mxu0
      %v556 = vadd.f32 0.0, %v555
      %v557 = vpop.f32.mrf.mxu0
      %v558 = vpop.f32.mrf.mxu0
      %v559 = vpop.f32.mrf.mxu0
      %560 = vdwg.mxu0
      %v561 = vrcp.pop %v511
      %v562 = vmul.f32 %v556, %v561
      %563 = vrot.lane.b32.xlu0 %v417, 104
      %v564 = vpop.permute.xlu0 %563
      %566 = vrot.lane.b32.xlu0 %v395, 120
      %v567 = vpop.permute.xlu0 %566
      %v569 = vsel %vm426, %v564, %v567
      %570 = vrot.lane.b32.xlu0 %v401, 16
      %v571 = vpop.permute.xlu0 %570
      %v573 = vmul.f32 %v395, %v571
      %v574 = vmul.f32 %v569, %v402
      %576 = vrot.lane.b32.xlu0 %v574, 16
      %v577 = vpop.permute.xlu0 %576
      %v579 = vadd.f32 %v573, %v577
      %580 = vrot.lane.b32.xlu0 %v417, 40
      %v581 = vpop.permute.xlu0 %580
      %583 = vrot.lane.b32.xlu0 %v395, 56
      %v584 = vpop.permute.xlu0 %583
      %v586 = vsel %vm426, %v581, %v584
      %587 = vrot.lane.b32.xlu0 %v401, 80
      %v588 = vpop.permute.xlu0 %587
      %v590 = vmul.f32 %v395, %v588
      %v591 = vmul.f32 %v586, %v402
      %593 = vrot.lane.b32.xlu0 %v591, 80
      %v594 = vpop.permute.xlu0 %593
      %v596 = vadd.f32 %v590, %v594
      %v597 = vpack.c.bf16 %v579, %v579
      %v598 = vpack.c.bf16 %v596, %v596
      %600 = vrot.lane.b32.xlu0 %v597, 112
      %v601 = vpop.permute.xlu0 %600
      %603 = vrot.lane.b32.xlu0 %v598, 48
      %v604 = vpop.permute.xlu0 %603
      %v606 = vsel %vm454, %v601, 0
      %v609 = vsel %vm454, %v604, 0
      %611 = vmatprep.subr.bf16.mxu0 0
      %612 = vmatpush1.bf16.xpose.msra.mxu0 0
      %613 = vmatprep.subr.bf16.mxu0 0
      %614 = vmatpush1.bf16.xpose.msra.mxu0 0
      %615 = vmatprep.subr.bf16.mxu0 0
      %616 = vmatpush1.bf16.xpose.msra.mxu0 0
      %617 = vmatprep.subr.bf16.mxu0 0
      %618 = vmatpush1.bf16.xpose.msra.mxu0 0
      %619 = vmatprep.subr.bf16.mxu0 0
      %620 = vmatpush1.bf16.xpose.msra.mxu0 0
      %621 = vmatprep.subr.bf16.mxu0 0
      %622 = vmatpush1.bf16.xpose.msra.mxu0 0
      %623 = vmatprep.subr.bf16.mxu0 0
      %624 = vmatpush1.bf16.xpose.msra.mxu0 0
      %625 = vmatprep.subr.bf16.mxu0 0
      %626 = vmatpush1.bf16.xpose.msra.mxu0 %v609
      %627 = vmatprep.subr.bf16.mxu0 0
      %628 = vmatpush2.bf16.xpose.msra.mxu0 0
      %629 = vmatprep.subr.bf16.mxu0 0
      %630 = vmatpush2.bf16.xpose.msra.mxu0 0
      %631 = vmatprep.subr.bf16.mxu0 0
      %632 = vmatpush2.bf16.xpose.msra.mxu0 0
      %633 = vmatprep.subr.bf16.mxu0 0
      %634 = vmatpush2.bf16.xpose.msra.mxu0 0
      %635 = vmatprep.subr.bf16.mxu0 0
      %636 = vmatpush2.bf16.xpose.msra.mxu0 0
      %637 = vmatprep.subr.bf16.mxu0 0
      %638 = vmatpush2.bf16.xpose.msra.mxu0 0
      %639 = vmatprep.subr.bf16.mxu0 0
      %640 = vmatpush2.bf16.xpose.msra.mxu0 0
      %641 = vmatprep.subr.bf16.mxu0 0
      %642 = vmatpush2.bf16.xpose.msra.mxu0 0
      %643 = vmatprep.mubr.bf16.mxu0 0
      %644 = vmatmul.mubr.bf16.gmra.mxu0 %v606
      %v645 = vpop.f32.mrf.mxu0
      %v646 = vadd.f32 0.0, %v645
      %v647 = vpop.f32.mrf.mxu0
      %v648 = vpop.f32.mrf.mxu0
      %v649 = vpop.f32.mrf.mxu0
      %650 = vdwg.mxu0
      %v651 = vmul.f32 %v646, 0.25
      %v652 = vadd.f32 %v651, %v416
      %v653 = vsel %vm426, %v652, -inf
      %654 = vmax.xlane.f32.xlu0 %v653
      %v655 = vpop.xlane.xlu0 %654
      %v656 = vsub.f32 %v652, %v655
      %v657 = vmul.f32 %v656, 1.442695
      %v658 = vpow.pop %v657
      %v659 = vsel %vm426, %v658, 0.0
      %660 = vadd.xlane.f32.xlu0 %v659
      %v661 = vpop.xlane.xlu0 %660
      %v662 = vpack.c.bf16 %v658, %v658
      %664 = vrot.lane.b32.xlu0 %v513, 112
      %v665 = vpop.permute.xlu0 %664
      %v667 = vsel %vm426, %v662, 0
      %v670 = vsel %vm517, %v665, 0
      %672 = vmatprep.subr.bf16.mxu0 0
      %673 = vmatpush1.bf16.msra.mxu0 0
      %674 = vmatprep.subr.bf16.mxu0 0
      %675 = vmatpush1.bf16.msra.mxu0 0
      %676 = vmatprep.subr.bf16.mxu0 0
      %677 = vmatpush1.bf16.msra.mxu0 0
      %678 = vmatprep.subr.bf16.mxu0 0
      %679 = vmatpush1.bf16.msra.mxu0 0
      %680 = vmatprep.subr.bf16.mxu0 0
      %681 = vmatpush1.bf16.msra.mxu0 0
      %682 = vmatprep.subr.bf16.mxu0 0
      %683 = vmatpush1.bf16.msra.mxu0 0
      %684 = vmatprep.subr.bf16.mxu0 0
      %685 = vmatpush1.bf16.msra.mxu0 0
      %686 = vmatprep.subr.bf16.mxu0 0
      %687 = vmatpush1.bf16.msra.mxu0 %v670
      %688 = vmatprep.subr.bf16.mxu0 0
      %689 = vmatpush2.bf16.msra.mxu0 0
      %690 = vmatprep.subr.bf16.mxu0 0
      %691 = vmatpush2.bf16.msra.mxu0 0
      %692 = vmatprep.subr.bf16.mxu0 0
      %693 = vmatpush2.bf16.msra.mxu0 0
      %694 = vmatprep.subr.bf16.mxu0 0
      %695 = vmatpush2.bf16.msra.mxu0 0
      %696 = vmatprep.subr.bf16.mxu0 0
      %697 = vmatpush2.bf16.msra.mxu0 0
      %698 = vmatprep.subr.bf16.mxu0 0
      %699 = vmatpush2.bf16.msra.mxu0 0
      %700 = vmatprep.subr.bf16.mxu0 0
      %701 = vmatpush2.bf16.msra.mxu0 0
      %702 = vmatprep.subr.bf16.mxu0 0
      %703 = vmatpush2.bf16.msra.mxu0 0
      %704 = vmatprep.mubr.bf16.mxu0 0
      %705 = vmatmul.mubr.bf16.gmra.mxu0 %v667
      %v706 = vpop.f32.mrf.mxu0
      %v707 = vadd.f32 0.0, %v706
      %v708 = vpop.f32.mrf.mxu0
      %v709 = vpop.f32.mrf.mxu0
      %v710 = vpop.f32.mrf.mxu0
      %711 = vdwg.mxu0
      %v712 = vrcp.pop %v661
      %v713 = vmul.f32 %v707, %v712
      %714 = vrot.lane.b32.xlu0 %v417, 88
      %v715 = vpop.permute.xlu0 %714
      %717 = vrot.lane.b32.xlu0 %v395, 104
      %v718 = vpop.permute.xlu0 %717
      %v720 = vsel %vm426, %v715, %v718
      %721 = vrot.lane.b32.xlu0 %v401, 32
      %v722 = vpop.permute.xlu0 %721
      %v724 = vmul.f32 %v395, %v722
      %v725 = vmul.f32 %v720, %v402
      %727 = vrot.lane.b32.xlu0 %v725, 32
      %v728 = vpop.permute.xlu0 %727
      %v730 = vadd.f32 %v724, %v728
      %731 = vrot.lane.b32.xlu0 %v417, 24
      %v732 = vpop.permute.xlu0 %731
      %734 = vrot.lane.b32.xlu0 %v395, 40
      %v735 = vpop.permute.xlu0 %734
      %v737 = vsel %vm426, %v732, %v735
      %738 = vrot.lane.b32.xlu0 %v401, 96
      %v739 = vpop.permute.xlu0 %738
      %v741 = vmul.f32 %v395, %v739
      %v742 = vmul.f32 %v737, %v402
      %744 = vrot.lane.b32.xlu0 %v742, 96
      %v745 = vpop.permute.xlu0 %744
      %v747 = vadd.f32 %v741, %v745
      %v748 = vpack.c.bf16 %v730, %v730
      %v749 = vpack.c.bf16 %v747, %v747
      %751 = vrot.lane.b32.xlu0 %v748, 96
      %v752 = vpop.permute.xlu0 %751
      %754 = vrot.lane.b32.xlu0 %v749, 32
      %v755 = vpop.permute.xlu0 %754
      %v757 = vsel %vm454, %v752, 0
      %v760 = vsel %vm454, %v755, 0
      %762 = vmatprep.subr.bf16.mxu0 0
      %763 = vmatpush1.bf16.xpose.msra.mxu0 0
      %764 = vmatprep.subr.bf16.mxu0 0
      %765 = vmatpush1.bf16.xpose.msra.mxu0 0
      %766 = vmatprep.subr.bf16.mxu0 0
      %767 = vmatpush1.bf16.xpose.msra.mxu0 0
      %768 = vmatprep.subr.bf16.mxu0 0
      %769 = vmatpush1.bf16.xpose.msra.mxu0 0
      %770 = vmatprep.subr.bf16.mxu0 0
      %771 = vmatpush1.bf16.xpose.msra.mxu0 0
      %772 = vmatprep.subr.bf16.mxu0 0
      %773 = vmatpush1.bf16.xpose.msra.mxu0 0
      %774 = vmatprep.subr.bf16.mxu0 0
      %775 = vmatpush1.bf16.xpose.msra.mxu0 0
      %776 = vmatprep.subr.bf16.mxu0 0
      %777 = vmatpush1.bf16.xpose.msra.mxu0 %v760
      %778 = vmatprep.subr.bf16.mxu0 0
      %779 = vmatpush2.bf16.xpose.msra.mxu0 0
      %780 = vmatprep.subr.bf16.mxu0 0
      %781 = vmatpush2.bf16.xpose.msra.mxu0 0
      %782 = vmatprep.subr.bf16.mxu0 0
      %783 = vmatpush2.bf16.xpose.msra.mxu0 0
      %784 = vmatprep.subr.bf16.mxu0 0
      %785 = vmatpush2.bf16.xpose.msra.mxu0 0
      %786 = vmatprep.subr.bf16.mxu0 0
      %787 = vmatpush2.bf16.xpose.msra.mxu0 0
      %788 = vmatprep.subr.bf16.mxu0 0
      %789 = vmatpush2.bf16.xpose.msra.mxu0 0
      %790 = vmatprep.subr.bf16.mxu0 0
      %791 = vmatpush2.bf16.xpose.msra.mxu0 0
      %792 = vmatprep.subr.bf16.mxu0 0
      %793 = vmatpush2.bf16.xpose.msra.mxu0 0
      %794 = vmatprep.mubr.bf16.mxu0 0
      %795 = vmatmul.mubr.bf16.gmra.mxu0 %v757
      %v796 = vpop.f32.mrf.mxu0
      %v797 = vadd.f32 0.0, %v796
      %v798 = vpop.f32.mrf.mxu0
      %v799 = vpop.f32.mrf.mxu0
      %v800 = vpop.f32.mrf.mxu0
      %801 = vdwg.mxu0
      %v802 = vmul.f32 %v797, 0.25
      %v803 = vadd.f32 %v802, %v416
      %v804 = vsel %vm426, %v803, -inf
      %805 = vmax.xlane.f32.xlu0 %v804
      %v806 = vpop.xlane.xlu0 %805
      %v807 = vsub.f32 %v803, %v806
      %v808 = vmul.f32 %v807, 1.442695
      %v809 = vpow.pop %v808
      %v810 = vsel %vm426, %v809, 0.0
      %811 = vadd.xlane.f32.xlu0 %v810
      %v812 = vpop.xlane.xlu0 %811
      %v813 = vpack.c.bf16 %v809, %v809
      %814 = vrot.lane.b32.xlu0 %v513, 96
      %v815 = vpop.permute.xlu0 %814
      %v817 = vsel %vm426, %v813, 0
      %v820 = vsel %vm517, %v815, 0
      %822 = vmatprep.subr.bf16.mxu0 0
      %823 = vmatpush1.bf16.msra.mxu0 0
      %824 = vmatprep.subr.bf16.mxu0 0
      %825 = vmatpush1.bf16.msra.mxu0 0
      %826 = vmatprep.subr.bf16.mxu0 0
      %827 = vmatpush1.bf16.msra.mxu0 0
      %828 = vmatprep.subr.bf16.mxu0 0
      %829 = vmatpush1.bf16.msra.mxu0 0
      %830 = vmatprep.subr.bf16.mxu0 0
      %831 = vmatpush1.bf16.msra.mxu0 0
      %832 = vmatprep.subr.bf16.mxu0 0
      %833 = vmatpush1.bf16.msra.mxu0 0
      %834 = vmatprep.subr.bf16.mxu0 0
      %835 = vmatpush1.bf16.msra.mxu0 0
      %836 = vmatprep.subr.bf16.mxu0 0
      %837 = vmatpush1.bf16.msra.mxu0 %v820
      %838 = vmatprep.subr.bf16.mxu0 0
      %839 = vmatpush2.bf16.msra.mxu0 0
      %840 = vmatprep.subr.bf16.mxu0 0
      %841 = vmatpush2.bf16.msra.mxu0 0
      %842 = vmatprep.subr.bf16.mxu0 0
      %843 = vmatpush2.bf16.msra.mxu0 0
      %844 = vmatprep.subr.bf16.mxu0 0
      %845 = vmatpush2.bf16.msra.mxu0 0
      %846 = vmatprep.subr.bf16.mxu0 0
      %847 = vmatpush2.bf16.msra.mxu0 0
      %848 = vmatprep.subr.bf16.mxu0 0
      %849 = vmatpush2.bf16.msra.mxu0 0
      %850 = vmatprep.subr.bf16.mxu0 0
      %851 = vmatpush2.bf16.msra.mxu0 0
      %852 = vmatprep.subr.bf16.mxu0 0
      %853 = vmatpush2.bf16.msra.mxu0 0
      %854 = vmatprep.mubr.bf16.mxu0 0
      %855 = vmatmul.mubr.bf16.gmra.mxu0 %v817
      %v856 = vpop.f32.mrf.mxu0
      %v857 = vadd.f32 0.0, %v856
      %v858 = vpop.f32.mrf.mxu0
      %v859 = vpop.f32.mrf.mxu0
      %v860 = vpop.f32.mrf.mxu0
      %861 = vdwg.mxu0
      %v862 = vrcp.pop %v812
      %v863 = vmul.f32 %v857, %v862
      %864 = vrot.lane.b32.xlu0 %v417, 72
      %v865 = vpop.permute.xlu0 %864
      %867 = vrot.lane.b32.xlu0 %v395, 88
      %v868 = vpop.permute.xlu0 %867
      %v870 = vsel %vm426, %v865, %v868
      %871 = vrot.lane.b32.xlu0 %v401, 48
      %v872 = vpop.permute.xlu0 %871
      %v874 = vmul.f32 %v395, %v872
      %v875 = vmul.f32 %v870, %v402
      %877 = vrot.lane.b32.xlu0 %v875, 48
      %v878 = vpop.permute.xlu0 %877
      %v880 = vadd.f32 %v874, %v878
      %881 = vrot.lane.b32.xlu0 %v417, 8
      %v882 = vpop.permute.xlu0 %881
      %884 = vrot.lane.b32.xlu0 %v395, 24
      %v885 = vpop.permute.xlu0 %884
      %v887 = vsel %vm426, %v882, %v885
      %888 = vrot.lane.b32.xlu0 %v401, 112
      %v889 = vpop.permute.xlu0 %888
      %v891 = vmul.f32 %v395, %v889
      %v892 = vmul.f32 %v887, %v402
      %894 = vrot.lane.b32.xlu0 %v892, 112
      %v895 = vpop.permute.xlu0 %894
      %v897 = vadd.f32 %v891, %v895
      %v898 = vpack.c.bf16 %v880, %v880
      %v899 = vpack.c.bf16 %v897, %v897
      %901 = vrot.lane.b32.xlu0 %v898, 80
      %v902 = vpop.permute.xlu0 %901
      %904 = vrot.lane.b32.xlu0 %v899, 16
      %v905 = vpop.permute.xlu0 %904
      %v907 = vsel %vm454, %v902, 0
      %v910 = vsel %vm454, %v905, 0
      %912 = vmatprep.subr.bf16.mxu0 0
      %913 = vmatpush1.bf16.xpose.msra.mxu0 0
      %914 = vmatprep.subr.bf16.mxu0 0
      %915 = vmatpush1.bf16.xpose.msra.mxu0 0
      %916 = vmatprep.subr.bf16.mxu0 0
      %917 = vmatpush1.bf16.xpose.msra.mxu0 0
      %918 = vmatprep.subr.bf16.mxu0 0
      %919 = vmatpush1.bf16.xpose.msra.mxu0 0
      %920 = vmatprep.subr.bf16.mxu0 0
      %921 = vmatpush1.bf16.xpose.msra.mxu0 0
      %922 = vmatprep.subr.bf16.mxu0 0
      %923 = vmatpush1.bf16.xpose.msra.mxu0 0
      %924 = vmatprep.subr.bf16.mxu0 0
      %925 = vmatpush1.bf16.xpose.msra.mxu0 0
      %926 = vmatprep.subr.bf16.mxu0 0
      %927 = vmatpush1.bf16.xpose.msra.mxu0 %v910
      %928 = vmatprep.subr.bf16.mxu0 0
      %929 = vmatpush2.bf16.xpose.msra.mxu0 0
      %930 = vmatprep.subr.bf16.mxu0 0
      %931 = vmatpush2.bf16.xpose.msra.mxu0 0
      %932 = vmatprep.subr.bf16.mxu0 0
      %933 = vmatpush2.bf16.xpose.msra.mxu0 0
      %934 = vmatprep.subr.bf16.mxu0 0
      %935 = vmatpush2.bf16.xpose.msra.mxu0 0
      %936 = vmatprep.subr.bf16.mxu0 0
      %937 = vmatpush2.bf16.xpose.msra.mxu0 0
      %938 = vmatprep.subr.bf16.mxu0 0
      %939 = vmatpush2.bf16.xpose.msra.mxu0 0
      %940 = vmatprep.subr.bf16.mxu0 0
      %941 = vmatpush2.bf16.xpose.msra.mxu0 0
      %942 = vmatprep.subr.bf16.mxu0 0
      %943 = vmatpush2.bf16.xpose.msra.mxu0 0
      %944 = vmatprep.mubr.bf16.mxu0 0
      %945 = vmatmul.mubr.bf16.gmra.mxu0 %v907
      %v946 = vpop.f32.mrf.mxu0
      %v947 = vadd.f32 0.0, %v946
      %v948 = vpop.f32.mrf.mxu0
      %v949 = vpop.f32.mrf.mxu0
      %v950 = vpop.f32.mrf.mxu0
      %951 = vdwg.mxu0
      %v952 = vmul.f32 %v947, 0.25
      %v953 = vadd.f32 %v952, %v416
      %v954 = vsel %vm426, %v953, -inf
      %955 = vmax.xlane.f32.xlu0 %v954
      %v956 = vpop.xlane.xlu0 %955
      %v957 = vsub.f32 %v953, %v956
      %v958 = vmul.f32 %v957, 1.442695
      %v959 = vpow.pop %v958
      %v960 = vsel %vm426, %v959, 0.0
      %961 = vadd.xlane.f32.xlu0 %v960
      %v962 = vpop.xlane.xlu0 %961
      %v963 = vpack.c.bf16 %v959, %v959
      %964 = vrot.lane.b32.xlu0 %v513, 80
      %v965 = vpop.permute.xlu0 %964
      %v967 = vsel %vm426, %v963, 0
      %v970 = vsel %vm517, %v965, 0
      %972 = vmatprep.subr.bf16.mxu0 0
      %973 = vmatpush1.bf16.msra.mxu0 0
      %974 = vmatprep.subr.bf16.mxu0 0
      %975 = vmatpush1.bf16.msra.mxu0 0
      %976 = vmatprep.subr.bf16.mxu0 0
      %977 = vmatpush1.bf16.msra.mxu0 0
      %978 = vmatprep.subr.bf16.mxu0 0
      %979 = vmatpush1.bf16.msra.mxu0 0
      %980 = vmatprep.subr.bf16.mxu0 0
      %981 = vmatpush1.bf16.msra.mxu0 0
      %982 = vmatprep.subr.bf16.mxu0 0
      %983 = vmatpush1.bf16.msra.mxu0 0
      %984 = vmatprep.subr.bf16.mxu0 0
      %985 = vmatpush1.bf16.msra.mxu0 0
      %986 = vmatprep.subr.bf16.mxu0 0
      %987 = vmatpush1.bf16.msra.mxu0 %v970
      %988 = vmatprep.subr.bf16.mxu0 0
      %989 = vmatpush2.bf16.msra.mxu0 0
      %990 = vmatprep.subr.bf16.mxu0 0
      %991 = vmatpush2.bf16.msra.mxu0 0
      %992 = vmatprep.subr.bf16.mxu0 0
      %993 = vmatpush2.bf16.msra.mxu0 0
      %994 = vmatprep.subr.bf16.mxu0 0
      %995 = vmatpush2.bf16.msra.mxu0 0
      %996 = vmatprep.subr.bf16.mxu0 0
      %997 = vmatpush2.bf16.msra.mxu0 0
      %998 = vmatprep.subr.bf16.mxu0 0
      %999 = vmatpush2.bf16.msra.mxu0 0
      %1000 = vmatprep.subr.bf16.mxu0 0
      %1001 = vmatpush2.bf16.msra.mxu0 0
      %1002 = vmatprep.subr.bf16.mxu0 0
      %1003 = vmatpush2.bf16.msra.mxu0 0
      %1004 = vmatprep.mubr.bf16.mxu0 0
      %1005 = vmatmul.mubr.bf16.gmra.mxu0 %v967
      %v1006 = vpop.f32.mrf.mxu0
      %v1007 = vadd.f32 0.0, %v1006
      %v1008 = vpop.f32.mrf.mxu0
      %v1009 = vpop.f32.mrf.mxu0
      %v1010 = vpop.f32.mrf.mxu0
      %1011 = vdwg.mxu0
      %v1012 = vrcp.pop %v962
      %v1013 = vmul.f32 %v1007, %v1012
      %1015 = vrot.lane.b32.xlu0 %v713, 16
      %v1016 = vpop.permute.xlu0 %1015
      %1019 = vrot.lane.b32.xlu0 %v863, 32
      %v1020 = vpop.permute.xlu0 %1019
      %1023 = vrot.lane.b32.xlu0 %v1013, 48
      %v1024 = vpop.permute.xlu0 %1023
      %v1026 = vsel %vm454, %v562, %v1016
      %vm1027 = vcmask 261120
      %v1028 = vsel %vm1027, %v1026, %v1020
      %vm1029 = vcmask 392192
      %v1030 = vsel %vm1029, %v1028, %v1024
      %v1031 = vpack.c.bf16 %v1030, %v1030
      %v1032 = vld [vmem:[%s3] sm:$0xf]
      %v1033 = vld [vmem:[%s3 + $0x4] sm:$0xf]
      %v1034 = vld [vmem:[%s3 + $0x8] sm:$0xf]
      %v1035 = vld [vmem:[%s3 + $0xc] sm:$0xf]
      %v1036 = vld [vmem:[%s3 + $0x10] sm:$0xf]
      %v1037 = vld [vmem:[%s3 + $0x14] sm:$0xf]
      %v1038 = vld [vmem:[%s3 + $0x18] sm:$0xf]
      %v1039 = vld [vmem:[%s3 + $0x1c] sm:$0xf]
      %v1048 = vunpack.c.l.b16 %v1032
      %v1049 = vunpack.c.l.b16 %v1033
      %v1050 = vunpack.c.l.b16 %v1034
      %v1051 = vunpack.c.l.b16 %v1035
      %v1052 = vunpack.c.l.b16 %v1036
      %v1053 = vunpack.c.l.b16 %v1037
      %v1054 = vunpack.c.l.b16 %v1038
      %v1055 = vunpack.c.l.b16 %v1039
      %v1056 = vpack.c.b16 %v1049, %v1048
      %v1057 = vpack.c.b16 %v1051, %v1050
      %v1058 = vpack.c.b16 %v1053, %v1052
      %v1059 = vpack.c.b16 %v1055, %v1054
      %v1065 = vsel %vm291, %v1031, 0
      %1067 = vmatprep.subr.bf16.mxu0 0
      %1068 = vmatpush1.bf16.msra.mxu0 0
      %1069 = vmatprep.subr.bf16.mxu0 0
      %1070 = vmatpush1.bf16.msra.mxu0 0
      %1071 = vmatprep.subr.bf16.mxu0 0
      %1072 = vmatpush1.bf16.msra.mxu0 0
      %1073 = vmatprep.subr.bf16.mxu0 0
      %1074 = vmatpush1.bf16.msra.mxu0 0
      %1075 = vmatprep.subr.bf16.mxu0 0
      %1076 = vmatpush1.bf16.msra.mxu0 %v1059
      %1077 = vmatprep.subr.bf16.mxu0 0
      %1078 = vmatpush1.bf16.msra.mxu0 %v1058
      %1079 = vmatprep.subr.bf16.mxu0 0
      %1080 = vmatpush1.bf16.msra.mxu0 %v1057
      %1081 = vmatprep.subr.bf16.mxu0 0
      %1082 = vmatpush1.bf16.msra.mxu0 %v1056
      %1083 = vmatprep.subr.bf16.mxu0 0
      %1084 = vmatpush2.bf16.msra.mxu0 0
      %1085 = vmatprep.subr.bf16.mxu0 0
      %1086 = vmatpush2.bf16.msra.mxu0 0
      %1087 = vmatprep.subr.bf16.mxu0 0
      %1088 = vmatpush2.bf16.msra.mxu0 0
      %1089 = vmatprep.subr.bf16.mxu0 0
      %1090 = vmatpush2.bf16.msra.mxu0 0
      %1091 = vmatprep.subr.bf16.mxu0 0
      %1092 = vmatpush2.bf16.msra.mxu0 0
      %1093 = vmatprep.subr.bf16.mxu0 0
      %1094 = vmatpush2.bf16.msra.mxu0 0
      %1095 = vmatprep.subr.bf16.mxu0 0
      %1096 = vmatpush2.bf16.msra.mxu0 0
      %1097 = vmatprep.subr.bf16.mxu0 0
      %1098 = vmatpush2.bf16.msra.mxu0 0
      %1099 = vmatprep.mubr.bf16.mxu0 0
      %1100 = vmatmul.mubr.bf16.gmra.mxu0 %v1065
      %v1101 = vpop.f32.mrf.mxu0
      %v1102 = vadd.f32 0.0, %v1101
      %v1103 = vpop.f32.mrf.mxu0
      %v1104 = vpop.f32.mrf.mxu0
      %v1105 = vpop.f32.mrf.mxu0
      %1106 = vdwg.mxu0
      %v1107 = vadd.f32 %v289, %v1102
      %1108 = vst.msk [vmem:[%s287] sm:$0xff] %vm291, %v1107
      %p1109 = scmp.lt.s32.totalorder %s18, 1
      %s1110 = scalar_select %p1109, %s18, 1
      %s1111 = smul.addr %s1110, 8
      %s1112 = scalar_lea.vmem %s7, %s1111
      // Predicated region
      $region49: #{forward.5} parent=47 // pred_check
        %p1113 = pneg %p193
      $region50: #{forward.5} parent=47 // pred_check_branch
        %1115 = sbr.rel (%p1113) target = $region52
      $region51: #{forward.5} parent=47 // pred_region
        _
      $region52: #{forward.5} parent=47 // pred_fallthru
        _
    $region48: #{forward.5} parent=5 // pred_fallthru
      _
    %p1116 = scmp.le.s32.totalorder 2, %s13
    // Predicated region
    $region53: #{forward.5} parent=5 // pred_check
      %p1117 = pneg %p1116
    $region54: #{forward.5} parent=5 // pred_check_branch
      %1119 = sbr.rel (%p1117) target = $region56
    $region55: #{forward.5} parent=5 // pred_region
      %s1120 = ssub.s32 %s13, 2
      // Predicated region
      $region57: #{forward.5} parent=55 // pred_check
        %p1121 = pneg %p199
      $region58: #{forward.5} parent=55 // pred_check_branch
        %1123 = sbr.rel (%p1121) target = $region60
      $region59: #{forward.5} parent=55 // pred_region
        %p1124 = scmp.lt.s32.totalorder %s19, 1
        %s1125 = scalar_select %p1124, %s19, 1
        %s1126 = smul.addr %s1125, 8
        %s1127 = scalar_lea.vmem %s7, %s1126
      $region60: #{forward.5} parent=55 // pred_fallthru
        _
    $region56: #{forward.5} parent=5 // pred_fallthru
      _
  $region6: #{forward.5} parent=0 // loop_footer
    %s17 = sadd.s32 1, %s13
  $region7: #{forward.5} parent=0 // loop_footer_branch
    %12 = sbr.rel target = $region3
  $region8: #{forward.5} parent=0 // loop_exit
    _

</llo_original>
